<compile_context>
chip_gen: v7x
topology: tpu7x:2x2x1
jax: 0.10.0
libtpu: 0.0.40
codegen_flags: <defaults>
</compile_context>

<pallas_src>
import jax
import jax.numpy as jnp
from jax.experimental import pallas as pl
from jax.experimental.pallas import tpu as pltpu

HIDDEN = 128


def _round_up(n: int, m: int) -> int:
    return ((n + m - 1) // m) * m


def _vmem_capacity_bytes() -> int:
    """Per-core VMEM capacity; conservative fallback if the query fails."""
    try:
        cap = int(pltpu.get_tpu_info().vmem_capacity_bytes)
        if cap > 0:
            return cap
    except Exception:
        pass
    return 64 << 20  # v7x per-TC VMEM (smallest of the three generations)


def ae_kernel(x_ref,
              w1_ref, b1_ref,
              w2_ref, b2_ref,
              w3_ref, b3_ref,
              w4_ref, b4_ref,
              recon_ref, code_ref):
    # MXU input dtype follows the weight dtype (f32 or bf16); accumulation and
    # the bias-add / ReLU epilogue are always f32.
    cd = w1_ref.dtype
    x = x_ref[...].astype(cd)

    # encoder hidden layer + relu
    h = jnp.dot(x, w1_ref[...], preferred_element_type=jnp.float32) + b1_ref[...]
    h = jnp.maximum(h, 0.0)

    # encoder output layer + relu  -> code
    code = jnp.dot(h.astype(cd), w2_ref[...],
                   preferred_element_type=jnp.float32) + b2_ref[...]
    code = jnp.maximum(code, 0.0)
    code_ref[...] = code.astype(code_ref.dtype)

    # decoder hidden layer + relu
    d = jnp.dot(code.astype(cd), w3_ref[...],
                preferred_element_type=jnp.float32) + b3_ref[...]
    d = jnp.maximum(d, 0.0)

    # decoder output layer + relu -> reconstructed
    r = jnp.dot(d.astype(cd), w4_ref[...],
                preferred_element_type=jnp.float32) + b4_ref[...]
    r = jnp.maximum(r, 0.0)
    recon_ref[...] = r.astype(recon_ref.dtype)


def _pick_batch_tile(B, D, x_itemsize, out_itemsize, weight_resident_bytes,
                     block_batch, min_grid_steps, vmem_budget):
    """Largest batch tile (multiple of 8) that fits the VMEM budget, capped so
    the grid gets at least `min_grid_steps` steps (v7x megacore)."""
    # Double-buffered x tile + double-buffered recon/code output tiles.
    per_row = 2 * D * x_itemsize + 2 * D * out_itemsize + 2 * HIDDEN * out_itemsize
    slack = 2 << 20  # compiler-internal scratch headroom
    avail = max(vmem_budget - weight_resident_bytes - slack, per_row * 8)
    tb_vmem = max(8, (avail // per_row) // 8 * 8)

    candidates = [_round_up(block_batch, 8), tb_vmem, _round_up(B, 8)]
    if min_grid_steps > 1 and B >= 8 * min_grid_steps:
        candidates.append(_round_up(pl.cdiv(B, min_grid_steps), 8))
    return max(8, min(candidates))


def ae_forward(x, params, *, block_batch=1024, out_dtype=None,
               min_grid_steps=2, single_buffer_weights=True):
    """x: (B, D).  params: dict of weights/biases.  Returns (recon, code)."""
    B, D = x.shape
    out_dtype = x.dtype if out_dtype is None else jnp.dtype(out_dtype)

    w1, b1 = params["w1"], params["b1"]
    w2, b2 = params["w2"], params["b2"]
    w3, b3 = params["w3"], params["b3"]
    w4, b4 = params["w4"], params["b4"]
    weight_arrays = (w1, b1, w2, b2, w3, b3, w4, b4)
    weight_bytes = sum(int(p.size) * p.dtype.itemsize for p in weight_arrays)

    vmem_cap = _vmem_capacity_bytes()
    vmem_budget = int(vmem_cap * 0.75)          # generation-aware budget

    x_it = jnp.dtype(x.dtype).itemsize
    o_it = out_dtype.itemsize
    # Size TB against the worst case (double-buffered weights) so it stays
    # valid even when the single-buffer request is not honored.
    TB = _pick_batch_tile(B, D, x_it, o_it, 2 * weight_bytes,
                          block_batch, min_grid_steps, vmem_budget)
    num_steps = pl.cdiv(B, TB)

    needed = (TB * (2 * D * x_it + 2 * D * o_it + 2 * HIDDEN * o_it)
              + 2 * weight_bytes)
    vmem_limit = int(min(vmem_cap * 0.9, max(32 << 20, needed + (8 << 20))))

    flops = 2 * B * (2 * D * HIDDEN + 2 * HIDDEN * HIDDEN)
    bytes_accessed = (B * D * x_it + weight_bytes
                      + B * D * o_it + B * HIDDEN * o_it)

    def build(weight_pipeline_mode):
        if weight_pipeline_mode is None:
            def wspec(shape):
                return pl.BlockSpec(shape, lambda i: (0, 0))
        else:
            def wspec(shape):
                return pl.BlockSpec(shape, lambda i: (0, 0),
                                    pipeline_mode=weight_pipeline_mode)
        return pl.pallas_call(
            ae_kernel,
            out_shape=(
                jax.ShapeDtypeStruct((B, D), out_dtype),       # reconstructed
                jax.ShapeDtypeStruct((B, HIDDEN), out_dtype),  # code
            ),
            grid=(num_steps,),
            in_specs=[
                pl.BlockSpec((TB, D), lambda i: (i, 0)),       # x tile
                wspec((D, HIDDEN)), wspec((1, HIDDEN)),        # encoder hidden
                wspec((HIDDEN, HIDDEN)), wspec((1, HIDDEN)),   # encoder output
                wspec((HIDDEN, HIDDEN)), wspec((1, HIDDEN)),   # decoder hidden
                wspec((HIDDEN, D)), wspec((1, D)),             # decoder output
            ],
            out_specs=(
                pl.BlockSpec((TB, D), lambda i: (i, 0)),
                pl.BlockSpec((TB, HIDDEN), lambda i: (i, 0)),
            ),
            compiler_params=pltpu.CompilerParams(
                # Batch axis is independent across tiles.  On v7x, if plain
                # "parallel" does not shard across the two TensorCores,
                # pltpu.CORE_PARALLEL / pl.core_map is the explicit option.
                dimension_semantics=("parallel",),
                vmem_limit_bytes=vmem_limit,
            ),
            cost_estimate=pl.CostEstimate(
                flops=flops, transcendentals=0, bytes_accessed=bytes_accessed),
        )

    args = (x, w1, b1, w2, b2, w3, b3, w4, b4)

    if single_buffer_weights:
        # Weights/biases have a constant block index -> a second pipeline
        # buffer is useless; request a single buffer, fall back if rejected.
        try:
            out = build(pl.Buffered(1))(*args)
            jax.block_until_ready(out)
            return out
        except Exception:
            pass
    return build(None)(*args)


def init_params(key, input_shape, weight_dtype=jnp.float32):
    """Deterministic parameter init (shapes match the PyTorch module).

    bf16 weights are recommended on ALL TPU generations (v5e/v6e/v7x): the MXU
    is natively bf16-in / f32-accumulate, and bf16 halves weight DMA + VMEM.
    Biases stay f32 (the bias-add / ReLU epilogue is always f32)."""
    ks = jax.random.split(key, 8)

    def lin(kw, kb, fan_in, fan_out):
        bound = 1.0 / jnp.sqrt(fan_in)   # PyTorch Linear default-ish
        w = jax.random.uniform(kw, (fan_in, fan_out), jnp.float32, -bound, bound)
        b = jax.random.uniform(kb, (1, fan_out), jnp.float32, -bound, bound)
        return w.astype(weight_dtype), b

    w1, b1 = lin(ks[0], ks[1], input_shape, HIDDEN)
    w2, b2 = lin(ks[2], ks[3], HIDDEN, HIDDEN)
    w3, b3 = lin(ks[4], ks[5], HIDDEN, HIDDEN)
    w4, b4 = lin(ks[6], ks[7], HIDDEN, input_shape)
    return {"w1": w1, "b1": b1, "w2": w2, "b2": b2,
            "w3": w3, "b3": b3, "w4": w4, "b4": b4}


def ae_reference(x, p):
    """Plain-JAX reference mirroring the kernel's cast structure."""
    cd = p["w1"].dtype
    relu = lambda v: jnp.maximum(v, 0.0)

    def layer(a, w, b):
        y = jnp.dot(a.astype(cd), w, preferred_element_type=jnp.float32) + b
        return relu(y)

    h = layer(x, p["w1"], p["b1"])
    code = layer(h, p["w2"], p["b2"])
    d = layer(code, p["w3"], p["b3"])
    r = layer(d, p["w4"], p["b4"])
    return r, code


if __name__ == "__main__":
    key = jax.random.PRNGKey(0)
    k_x, k_p = jax.random.split(key)

    B, D = 64, 256  # small, lane/sublane aligned shapes

    # --- f32 path, multi-step grid (>= 2 steps via min_grid_steps) ---------
    x = jax.random.normal(k_x, (B, D), jnp.float32)
    params_f32 = init_params(k_p, D, weight_dtype=jnp.float32)

    recon, code = ae_forward(x, params_f32)
    jax.block_until_ready((recon, code))
    recon_ref, code_ref = ae_reference(x, params_f32)
    assert recon.shape == (B, D) and code.shape == (B, HIDDEN)
    assert recon.dtype == jnp.float32 and code.dtype == jnp.float32
    assert jnp.allclose(recon, recon_ref, atol=1e-5, rtol=1e-5)
    assert jnp.allclose(code, code_ref, atol=1e-5, rtol=1e-5)

    # --- ragged batch: grid=cdiv(B,TB) with a partial last block (no pad) ---
    B2 = 40
    x2 = jax.random.normal(jax.random.PRNGKey(1), (B2, D), jnp.float32)
    recon2, code2 = ae_forward(x2, params_f32, block_batch=16)
    jax.block_until_ready((recon2, code2))
    recon2_ref, code2_ref = ae_reference(x2, params_f32)
    assert recon2.shape == (B2, D) and code2.shape == (B2, HIDDEN)
    assert jnp.allclose(recon2, recon2_ref, atol=1e-5, rtol=1e-5)
    assert jnp.allclose(code2, code2_ref, atol=1e-5, rtol=1e-5)

    # --- bf16 weights (recommended on all generations), f32 accumulation ----
    params_bf16 = init_params(k_p, D, weight_dtype=jnp.bfloat16)
    recon_b, code_b = ae_forward(x, params_bf16)
    jax.block_until_ready((recon_b, code_b))
    recon_b_ref, code_b_ref = ae_reference(x, params_bf16)
    assert jnp.allclose(recon_b, recon_b_ref, atol=5e-2, rtol=5e-2)
    assert jnp.allclose(code_b, code_b_ref, atol=5e-2, rtol=5e-2)

    # --- bf16 outputs: halves the dominant recon HBM writeback stream -------
    recon_c, code_c = ae_forward(x, params_bf16, out_dtype=jnp.bfloat16)
    jax.block_until_ready((recon_c, code_c))
    assert recon_c.dtype == jnp.bfloat16 and code_c.dtype == jnp.bfloat16
    assert jnp.allclose(recon_c.astype(jnp.float32), recon_b_ref,
                        atol=5e-2, rtol=5e-2)
    assert jnp.allclose(code_c.astype(jnp.float32), code_b_ref,
                        atol=5e-2, rtol=5e-2)

    print("KERNEL_OK")
</pallas_src>

<mosaic_0001>
module attributes {stable_mosaic.version = 11 : i64} {
  func.func @ae_kernel(%arg0: i32, %arg1: memref<32x256xf32, #tpu.memory_space<vmem>>, %arg2: memref<256x128xf32, #tpu.memory_space<vmem>>, %arg3: memref<1x128xf32, #tpu.memory_space<vmem>>, %arg4: memref<128x128xf32, #tpu.memory_space<vmem>>, %arg5: memref<1x128xf32, #tpu.memory_space<vmem>>, %arg6: memref<128x128xf32, #tpu.memory_space<vmem>>, %arg7: memref<1x128xf32, #tpu.memory_space<vmem>>, %arg8: memref<128x256xf32, #tpu.memory_space<vmem>>, %arg9: memref<1x256xf32, #tpu.memory_space<vmem>>, %arg10: memref<32x256xf32, #tpu.memory_space<vmem>>, %arg11: memref<32x128xf32, #tpu.memory_space<vmem>>) attributes {dimension_semantics = [#tpu.dimension_semantics<parallel>], iteration_bounds = array<i64: 2>, scalar_prefetch = 0 : i64, scratch_operands = 0 : i64, tpu.core_type = #tpu.core_type<tc>, window_params = [{transform_indices = @transform_0, window_bounds = array<i64: 32, 256>}, {pipeline_mode = #tpu.pipeline_mode<synchronous>, transform_indices = @transform_1, window_bounds = array<i64: 256, 128>}, {pipeline_mode = #tpu.pipeline_mode<synchronous>, transform_indices = @transform_2, window_bounds = array<i64: 1, 128>}, {pipeline_mode = #tpu.pipeline_mode<synchronous>, transform_indices = @transform_3, window_bounds = array<i64: 128, 128>}, {pipeline_mode = #tpu.pipeline_mode<synchronous>, transform_indices = @transform_4, window_bounds = array<i64: 1, 128>}, {pipeline_mode = #tpu.pipeline_mode<synchronous>, transform_indices = @transform_5, window_bounds = array<i64: 128, 128>}, {pipeline_mode = #tpu.pipeline_mode<synchronous>, transform_indices = @transform_6, window_bounds = array<i64: 1, 128>}, {pipeline_mode = #tpu.pipeline_mode<synchronous>, transform_indices = @transform_7, window_bounds = array<i64: 128, 256>}, {pipeline_mode = #tpu.pipeline_mode<synchronous>, transform_indices = @transform_8, window_bounds = array<i64: 1, 256>}, {transform_indices = @transform_9, window_bounds = array<i64: 32, 256>}, {transform_indices = @transform_10, window_bounds = array<i64: 32, 128>}]} {
    %c0 = arith.constant 0 : index
    %c0_0 = arith.constant 0 : index
    %0 = vector.load %arg1[%c0, %c0_0] : memref<32x256xf32, #tpu.memory_space<vmem>>, vector<32x256xf32>
    %c0_1 = arith.constant 0 : index
    %c0_2 = arith.constant 0 : index
    %1 = vector.load %arg2[%c0_1, %c0_2] : memref<256x128xf32, #tpu.memory_space<vmem>>, vector<256x128xf32>
    %cst = arith.constant dense<0.000000e+00> : vector<32x128xf32>
    %2 = tpu.matmul %0, %1, %cst {dimension_numbers = #tpu.dot_dimension_numbers<[1], [0], [0], [1], [0, 0, 1, 1], [], []>} : vector<32x256xf32>, vector<256x128xf32>, vector<32x128xf32> -> vector<32x128xf32>
    %c0_3 = arith.constant 0 : index
    %c0_4 = arith.constant 0 : index
    %3 = vector.load %arg3[%c0_3, %c0_4] : memref<1x128xf32, #tpu.memory_space<vmem>>, vector<1x128xf32>
    %4 = vector.broadcast %3 : vector<1x128xf32> to vector<32x128xf32>
    %5 = arith.addf %2, %4 : vector<32x128xf32>
    %cst_5 = arith.constant 0.000000e+00 : f32
    %6 = vector.broadcast %cst_5 : f32 to vector<32x128xf32>
    %7 = arith.maximumf %5, %6 : vector<32x128xf32>
    %c0_6 = arith.constant 0 : index
    %c0_7 = arith.constant 0 : index
    %8 = vector.load %arg4[%c0_6, %c0_7] : memref<128x128xf32, #tpu.memory_space<vmem>>, vector<128x128xf32>
    %cst_8 = arith.constant dense<0.000000e+00> : vector<32x128xf32>
    %9 = tpu.matmul %7, %8, %cst_8 {dimension_numbers = #tpu.dot_dimension_numbers<[1], [0], [0], [1], [0, 0, 1, 1], [], []>} : vector<32x128xf32>, vector<128x128xf32>, vector<32x128xf32> -> vector<32x128xf32>
    %c0_9 = arith.constant 0 : index
    %c0_10 = arith.constant 0 : index
    %10 = vector.load %arg5[%c0_9, %c0_10] : memref<1x128xf32, #tpu.memory_space<vmem>>, vector<1x128xf32>
    %11 = vector.broadcast %10 : vector<1x128xf32> to vector<32x128xf32>
    %12 = arith.addf %9, %11 : vector<32x128xf32>
    %cst_11 = arith.constant 0.000000e+00 : f32
    %13 = vector.broadcast %cst_11 : f32 to vector<32x128xf32>
    %14 = arith.maximumf %12, %13 : vector<32x128xf32>
    %c0_12 = arith.constant 0 : index
    %c0_13 = arith.constant 0 : index
    %15 = vector.load %arg11[%c0_12, %c0_13] : memref<32x128xf32, #tpu.memory_space<vmem>>, vector<32x128xf32>
    tpu.vector_store %arg11[%c0_12, %c0_13], %14 {strides = array<i32>} : memref<32x128xf32, #tpu.memory_space<vmem>>, vector<32x128xf32>,
    %c0_14 = arith.constant 0 : index
    %c0_15 = arith.constant 0 : index
    %16 = vector.load %arg6[%c0_14, %c0_15] : memref<128x128xf32, #tpu.memory_space<vmem>>, vector<128x128xf32>
    %cst_16 = arith.constant dense<0.000000e+00> : vector<32x128xf32>
    %17 = tpu.matmul %14, %16, %cst_16 {dimension_numbers = #tpu.dot_dimension_numbers<[1], [0], [0], [1], [0, 0, 1, 1], [], []>} : vector<32x128xf32>, vector<128x128xf32>, vector<32x128xf32> -> vector<32x128xf32>
    %c0_17 = arith.constant 0 : index
    %c0_18 = arith.constant 0 : index
    %18 = vector.load %arg7[%c0_17, %c0_18] : memref<1x128xf32, #tpu.memory_space<vmem>>, vector<1x128xf32>
    %19 = vector.broadcast %18 : vector<1x128xf32> to vector<32x128xf32>
    %20 = arith.addf %17, %19 : vector<32x128xf32>
    %cst_19 = arith.constant 0.000000e+00 : f32
    %21 = vector.broadcast %cst_19 : f32 to vector<32x128xf32>
    %22 = arith.maximumf %20, %21 : vector<32x128xf32>
    %c0_20 = arith.constant 0 : index
    %c0_21 = arith.constant 0 : index
    %23 = vector.load %arg8[%c0_20, %c0_21] : memref<128x256xf32, #tpu.memory_space<vmem>>, vector<128x256xf32>
    %cst_22 = arith.constant dense<0.000000e+00> : vector<32x256xf32>
    %24 = tpu.matmul %22, %23, %cst_22 {dimension_numbers = #tpu.dot_dimension_numbers<[1], [0], [0], [1], [0, 0, 1, 1], [], []>} : vector<32x128xf32>, vector<128x256xf32>, vector<32x256xf32> -> vector<32x256xf32>
    %c0_23 = arith.constant 0 : index
    %c0_24 = arith.constant 0 : index
    %25 = vector.load %arg9[%c0_23, %c0_24] : memref<1x256xf32, #tpu.memory_space<vmem>>, vector<1x256xf32>
    %26 = vector.broadcast %25 : vector<1x256xf32> to vector<32x256xf32>
    %27 = arith.addf %24, %26 : vector<32x256xf32>
    %cst_25 = arith.constant 0.000000e+00 : f32
    %28 = vector.broadcast %cst_25 : f32 to vector<32x256xf32>
    %29 = arith.maximumf %27, %28 : vector<32x256xf32>
    %c0_26 = arith.constant 0 : index
    %c0_27 = arith.constant 0 : index
    %30 = vector.load %arg10[%c0_26, %c0_27] : memref<32x256xf32, #tpu.memory_space<vmem>>, vector<32x256xf32>
    tpu.vector_store %arg10[%c0_26, %c0_27], %29 {strides = array<i32>} : memref<32x256xf32, #tpu.memory_space<vmem>>, vector<32x256xf32>,
    return
  }
  func.func @transform_0(%arg0: i32) -> (i32, i32) {
    %c0_i32 = arith.constant 0 : i32
    %c0_i32_0 = arith.constant 0 : i32
    return %arg0, %c0_i32 : i32, i32
  }
  func.func @transform_1(%arg0: i32) -> (i32, i32) {
    %c0_i32 = arith.constant 0 : i32
    %c0_i32_0 = arith.constant 0 : i32
    %c0_i32_1 = arith.constant 0 : i32
    return %c0_i32, %c0_i32_0 : i32, i32
  }
  func.func @transform_2(%arg0: i32) -> (i32, i32) {
    %c0_i32 = arith.constant 0 : i32
    %c0_i32_0 = arith.constant 0 : i32
    %c0_i32_1 = arith.constant 0 : i32
    return %c0_i32, %c0_i32_0 : i32, i32
  }
  func.func @transform_3(%arg0: i32) -> (i32, i32) {
    %c0_i32 = arith.constant 0 : i32
    %c0_i32_0 = arith.constant 0 : i32
    %c0_i32_1 = arith.constant 0 : i32
    return %c0_i32, %c0_i32_0 : i32, i32
  }
  func.func @transform_4(%arg0: i32) -> (i32, i32) {
    %c0_i32 = arith.constant 0 : i32
    %c0_i32_0 = arith.constant 0 : i32
    %c0_i32_1 = arith.constant 0 : i32
    return %c0_i32, %c0_i32_0 : i32, i32
  }
  func.func @transform_5(%arg0: i32) -> (i32, i32) {
    %c0_i32 = arith.constant 0 : i32
    %c0_i32_0 = arith.constant 0 : i32
    %c0_i32_1 = arith.constant 0 : i32
    return %c0_i32, %c0_i32_0 : i32, i32
  }
  func.func @transform_6(%arg0: i32) -> (i32, i32) {
    %c0_i32 = arith.constant 0 : i32
    %c0_i32_0 = arith.constant 0 : i32
    %c0_i32_1 = arith.constant 0 : i32
    return %c0_i32, %c0_i32_0 : i32, i32
  }
  func.func @transform_7(%arg0: i32) -> (i32, i32) {
    %c0_i32 = arith.constant 0 : i32
    %c0_i32_0 = arith.constant 0 : i32
    %c0_i32_1 = arith.constant 0 : i32
    return %c0_i32, %c0_i32_0 : i32, i32
  }
  func.func @transform_8(%arg0: i32) -> (i32, i32) {
    %c0_i32 = arith.constant 0 : i32
    %c0_i32_0 = arith.constant 0 : i32
    %c0_i32_1 = arith.constant 0 : i32
    return %c0_i32, %c0_i32_0 : i32, i32
  }
  func.func @transform_9(%arg0: i32) -> (i32, i32) {
    %c0_i32 = arith.constant 0 : i32
    %c0_i32_0 = arith.constant 0 : i32
    return %arg0, %c0_i32 : i32, i32
  }
  func.func @transform_10(%arg0: i32) -> (i32, i32) {
    %c0_i32 = arith.constant 0 : i32
    %c0_i32_0 = arith.constant 0 : i32
    return %arg0, %c0_i32 : i32, i32
  }
}

module attributes {stable_mosaic.version = 11 : i64} {
  func.func @ae_kernel(%arg0: i32, %arg1: memref<32x256xf32, #tpu.memory_space<vmem>>, %arg2: memref<256x128xf32, #tpu.memory_space<vmem>>, %arg3: memref<1x128xf32, #tpu.memory_space<vmem>>, %arg4: memref<128x128xf32, #tpu.memory_space<vmem>>, %arg5: memref<1x128xf32, #tpu.memory_space<vmem>>, %arg6: memref<128x128xf32, #tpu.memory_space<vmem>>, %arg7: memref<1x128xf32, #tpu.memory_space<vmem>>, %arg8: memref<128x256xf32, #tpu.memory_space<vmem>>, %arg9: memref<1x256xf32, #tpu.memory_space<vmem>>, %arg10: memref<32x256xf32, #tpu.memory_space<vmem>>, %arg11: memref<32x128xf32, #tpu.memory_space<vmem>>) attributes {dimension_semantics = [#tpu.dimension_semantics<parallel>], iteration_bounds = array<i64: 2>, scalar_prefetch = 0 : i64, scratch_operands = 0 : i64, tpu.core_type = #tpu.core_type<tc>, window_params = [{transform_indices = @transform_0, window_bounds = array<i64: 32, 256>}, {pipeline_mode = #tpu.pipeline_mode<synchronous>, transform_indices = @transform_1, window_bounds = array<i64: 256, 128>}, {pipeline_mode = #tpu.pipeline_mode<synchronous>, transform_indices = @transform_2, window_bounds = array<i64: 1, 128>}, {pipeline_mode = #tpu.pipeline_mode<synchronous>, transform_indices = @transform_3, window_bounds = array<i64: 128, 128>}, {pipeline_mode = #tpu.pipeline_mode<synchronous>, transform_indices = @transform_4, window_bounds = array<i64: 1, 128>}, {pipeline_mode = #tpu.pipeline_mode<synchronous>, transform_indices = @transform_5, window_bounds = array<i64: 128, 128>}, {pipeline_mode = #tpu.pipeline_mode<synchronous>, transform_indices = @transform_6, window_bounds = array<i64: 1, 128>}, {pipeline_mode = #tpu.pipeline_mode<synchronous>, transform_indices = @transform_7, window_bounds = array<i64: 128, 256>}, {pipeline_mode = #tpu.pipeline_mode<synchronous>, transform_indices = @transform_8, window_bounds = array<i64: 1, 256>}, {transform_indices = @transform_9, window_bounds = array<i64: 32, 256>}, {transform_indices = @transform_10, window_bounds = array<i64: 32, 128>}]} {
    %c0 = arith.constant 0 : index
    %c0_0 = arith.constant 0 : index
    %0 = vector.load %arg1[%c0, %c0_0] : memref<32x256xf32, #tpu.memory_space<vmem>>, vector<32x256xf32>
    %c0_1 = arith.constant 0 : index
    %c0_2 = arith.constant 0 : index
    %1 = vector.load %arg2[%c0_1, %c0_2] : memref<256x128xf32, #tpu.memory_space<vmem>>, vector<256x128xf32>
    %cst = arith.constant dense<0.000000e+00> : vector<32x128xf32>
    %2 = tpu.matmul %0, %1, %cst {dimension_numbers = #tpu.dot_dimension_numbers<[1], [0], [0], [1], [0, 0, 1, 1], [], []>} : vector<32x256xf32>, vector<256x128xf32>, vector<32x128xf32> -> vector<32x128xf32>
    %c0_3 = arith.constant 0 : index
    %c0_4 = arith.constant 0 : index
    %3 = vector.load %arg3[%c0_3, %c0_4] : memref<1x128xf32, #tpu.memory_space<vmem>>, vector<1x128xf32>
    %4 = vector.broadcast %3 : vector<1x128xf32> to vector<32x128xf32>
    %5 = arith.addf %2, %4 : vector<32x128xf32>
    %cst_5 = arith.constant 0.000000e+00 : f32
    %6 = vector.broadcast %cst_5 : f32 to vector<32x128xf32>
    %7 = arith.maximumf %5, %6 : vector<32x128xf32>
    %c0_6 = arith.constant 0 : index
    %c0_7 = arith.constant 0 : index
    %8 = vector.load %arg4[%c0_6, %c0_7] : memref<128x128xf32, #tpu.memory_space<vmem>>, vector<128x128xf32>
    %cst_8 = arith.constant dense<0.000000e+00> : vector<32x128xf32>
    %9 = tpu.matmul %7, %8, %cst_8 {dimension_numbers = #tpu.dot_dimension_numbers<[1], [0], [0], [1], [0, 0, 1, 1], [], []>} : vector<32x128xf32>, vector<128x128xf32>, vector<32x128xf32> -> vector<32x128xf32>
    %c0_9 = arith.constant 0 : index
    %c0_10 = arith.constant 0 : index
    %10 = vector.load %arg5[%c0_9, %c0_10] : memref<1x128xf32, #tpu.memory_space<vmem>>, vector<1x128xf32>
    %11 = vector.broadcast %10 : vector<1x128xf32> to vector<32x128xf32>
    %12 = arith.addf %9, %11 : vector<32x128xf32>
    %cst_11 = arith.constant 0.000000e+00 : f32
    %13 = vector.broadcast %cst_11 : f32 to vector<32x128xf32>
    %14 = arith.maximumf %12, %13 : vector<32x128xf32>
    %c0_12 = arith.constant 0 : index
    %c0_13 = arith.constant 0 : index
    %15 = vector.load %arg11[%c0_12, %c0_13] : memref<32x128xf32, #tpu.memory_space<vmem>>, vector<32x128xf32>
    tpu.vector_store %arg11[%c0_12, %c0_13], %14 {strides = array<i32>} : memref<32x128xf32, #tpu.memory_space<vmem>>, vector<32x128xf32>,
    %c0_14 = arith.constant 0 : index
    %c0_15 = arith.constant 0 : index
    %16 = vector.load %arg6[%c0_14, %c0_15] : memref<128x128xf32, #tpu.memory_space<vmem>>, vector<128x128xf32>
    %cst_16 = arith.constant dense<0.000000e+00> : vector<32x128xf32>
    %17 = tpu.matmul %14, %16, %cst_16 {dimension_numbers = #tpu.dot_dimension_numbers<[1], [0], [0], [1], [0, 0, 1, 1], [], []>} : vector<32x128xf32>, vector<128x128xf32>, vector<32x128xf32> -> vector<32x128xf32>
    %c0_17 = arith.constant 0 : index
    %c0_18 = arith.constant 0 : index
    %18 = vector.load %arg7[%c0_17, %c0_18] : memref<1x128xf32, #tpu.memory_space<vmem>>, vector<1x128xf32>
    %19 = vector.broadcast %18 : vector<1x128xf32> to vector<32x128xf32>
    %20 = arith.addf %17, %19 : vector<32x128xf32>
    %cst_19 = arith.constant 0.000000e+00 : f32
    %21 = vector.broadcast %cst_19 : f32 to vector<32x128xf32>
    %22 = arith.maximumf %20, %21 : vector<32x128xf32>
    %c0_20 = arith.constant 0 : index
    %c0_21 = arith.constant 0 : index
    %23 = vector.load %arg8[%c0_20, %c0_21] : memref<128x256xf32, #tpu.memory_space<vmem>>, vector<128x256xf32>
    %cst_22 = arith.constant dense<0.000000e+00> : vector<32x256xf32>
    %24 = tpu.matmul %22, %23, %cst_22 {dimension_numbers = #tpu.dot_dimension_numbers<[1], [0], [0], [1], [0, 0, 1, 1], [], []>} : vector<32x128xf32>, vector<128x256xf32>, vector<32x256xf32> -> vector<32x256xf32>
    %c0_23 = arith.constant 0 : index
    %c0_24 = arith.constant 0 : index
    %25 = vector.load %arg9[%c0_23, %c0_24] : memref<1x256xf32, #tpu.memory_space<vmem>>, vector<1x256xf32>
    %26 = vector.broadcast %25 : vector<1x256xf32> to vector<32x256xf32>
    %27 = arith.addf %24, %26 : vector<32x256xf32>
    %cst_25 = arith.constant 0.000000e+00 : f32
    %28 = vector.broadcast %cst_25 : f32 to vector<32x256xf32>
    %29 = arith.maximumf %27, %28 : vector<32x256xf32>
    %c0_26 = arith.constant 0 : index
    %c0_27 = arith.constant 0 : index
    %30 = vector.load %arg10[%c0_26, %c0_27] : memref<32x256xf32, #tpu.memory_space<vmem>>, vector<32x256xf32>
    tpu.vector_store %arg10[%c0_26, %c0_27], %29 {strides = array<i32>} : memref<32x256xf32, #tpu.memory_space<vmem>>, vector<32x256xf32>,
    return
  }
  func.func @transform_0(%arg0: i32) -> (i32, i32) {
    %c0_i32 = arith.constant 0 : i32
    %c0_i32_0 = arith.constant 0 : i32
    return %arg0, %c0_i32 : i32, i32
  }
  func.func @transform_1(%arg0: i32) -> (i32, i32) {
    %c0_i32 = arith.constant 0 : i32
    %c0_i32_0 = arith.constant 0 : i32
    %c0_i32_1 = arith.constant 0 : i32
    return %c0_i32, %c0_i32_0 : i32, i32
  }
  func.func @transform_2(%arg0: i32) -> (i32, i32) {
    %c0_i32 = arith.constant 0 : i32
    %c0_i32_0 = arith.constant 0 : i32
    %c0_i32_1 = arith.constant 0 : i32
    return %c0_i32, %c0_i32_0 : i32, i32
  }
  func.func @transform_3(%arg0: i32) -> (i32, i32) {
    %c0_i32 = arith.constant 0 : i32
    %c0_i32_0 = arith.constant 0 : i32
    %c0_i32_1 = arith.constant 0 : i32
    return %c0_i32, %c0_i32_0 : i32, i32
  }
  func.func @transform_4(%arg0: i32) -> (i32, i32) {
    %c0_i32 = arith.constant 0 : i32
    %c0_i32_0 = arith.constant 0 : i32
    %c0_i32_1 = arith.constant 0 : i32
    return %c0_i32, %c0_i32_0 : i32, i32
  }
  func.func @transform_5(%arg0: i32) -> (i32, i32) {
    %c0_i32 = arith.constant 0 : i32
    %c0_i32_0 = arith.constant 0 : i32
    %c0_i32_1 = arith.constant 0 : i32
    return %c0_i32, %c0_i32_0 : i32, i32
  }
  func.func @transform_6(%arg0: i32) -> (i32, i32) {
    %c0_i32 = arith.constant 0 : i32
    %c0_i32_0 = arith.constant 0 : i32
    %c0_i32_1 = arith.constant 0 : i32
    return %c0_i32, %c0_i32_0 : i32, i32
  }
  func.func @transform_7(%arg0: i32) -> (i32, i32) {
    %c0_i32 = arith.constant 0 : i32
    %c0_i32_0 = arith.constant 0 : i32
    %c0_i32_1 = arith.constant 0 : i32
    return %c0_i32, %c0_i32_0 : i32, i32
  }
  func.func @transform_8(%arg0: i32) -> (i32, i32) {
    %c0_i32 = arith.constant 0 : i32
    %c0_i32_0 = arith.constant 0 : i32
    %c0_i32_1 = arith.constant 0 : i32
    return %c0_i32, %c0_i32_0 : i32, i32
  }
  func.func @transform_9(%arg0: i32) -> (i32, i32) {
    %c0_i32 = arith.constant 0 : i32
    %c0_i32_0 = arith.constant 0 : i32
    return %arg0, %c0_i32 : i32, i32
  }
  func.func @transform_10(%arg0: i32) -> (i32, i32) {
    %c0_i32 = arith.constant 0 : i32
    %c0_i32_0 = arith.constant 0 : i32
    return %arg0, %c0_i32 : i32, i32
  }
}

</mosaic_0001>

<llo_original>
// kernel: tpu_custom_call.1
$region0: #{tpu_custom_call.1}
  #allocation0 [shape = 'u32[]', space=smem, size = 0x4, offset = 0x4, fixed_abs, tag = 'smem constant byte address 0x4 - core index']
  #allocation1 [shape = 'u32[144,128]{1,0:T(1,128)}', space=vmem, size = 0x12000, scoped, tag = 'internal scratch']
  %s0 = inlined_call_operand.hbm [shape: f32[64,256], index: 0, kind: input, shape index: {}]
  %s1 = inlined_call_operand.hbm [shape: f32[256,128], index: 1, kind: input, shape index: {}]
  %s2 = inlined_call_operand.vmem [shape: f32[1,128], index: 2, kind: input, shape index: {}]
  %s3 = inlined_call_operand.hbm [shape: f32[128,128], index: 3, kind: input, shape index: {}]
  %s4 = inlined_call_operand.vmem [shape: f32[1,128], index: 4, kind: input, shape index: {}]
  %s5 = inlined_call_operand.hbm [shape: f32[128,128], index: 5, kind: input, shape index: {}]
  %s6 = inlined_call_operand.vmem [shape: f32[1,128], index: 6, kind: input, shape index: {}]
  %s7 = inlined_call_operand.hbm [shape: f32[128,256], index: 7, kind: input, shape index: {}]
  %s8 = inlined_call_operand.vmem [shape: f32[1,256], index: 8, kind: input, shape index: {}]
  %s9 = inlined_call_operand.hbm [shape: f32[64,256], index: 9, kind: output, shape index: {0}]
  %s10 = inlined_call_operand.hbm [shape: f32[64,128], index: 10, kind: output, shape index: {1}]
  %11 = xla_tuple %s9, %s10
  %s12 = sld [smem:[#allocation0]]
  $region97: #{tpu_custom_call.1} parent=0
    _
  %s14 = ssub.s32 1, %s12
  %s15 = scalar_select 0, %s14, %s12
  $region1: #{tpu_custom_call.1} parent=0
    #allocation2 [shape = 'u8[65536]{0}', space=vmem, size = 0x10000, scoped, tag = 'input window, operand 0']
    #allocation3 [shape = 's32[2]{0}', space=sflag, size = 0x8, scoped, tag = 'scoped memory for tpu_custom_call.1']
    #allocation4 [shape = 's32[2]{0}', space=sflag, size = 0x8, scoped, tag = 'scoped memory for tpu_custom_call.1']
    #allocation5 [shape = 'u8[131072]{0}', space=vmem, size = 0x20000, scoped, tag = 'input window, operand 1, single buffered']
    #allocation6 [shape = 's32[1]{0}', space=sflag, size = 0x4, scoped, tag = 'scoped memory for tpu_custom_call.1']
    #allocation7 [shape = 'u8[65536]{0}', space=vmem, size = 0x10000, scoped, tag = 'input window, operand 3, single buffered']
    #allocation8 [shape = 'u8[65536]{0}', space=vmem, size = 0x10000, scoped, tag = 'input window, operand 5, single buffered']
    #allocation9 [shape = 's32[1]{0}', space=sflag, size = 0x4, scoped, tag = 'scoped memory for tpu_custom_call.1']
    #allocation10 [shape = 'u8[131072]{0}', space=vmem, size = 0x20000, scoped, tag = 'input window, operand 7, single buffered']
    #allocation11 [shape = 'u8[65536]{0}', space=vmem, size = 0x10000, scoped, tag = 'output window, operand 0']
    #allocation12 [shape = 'u8[32768]{0}', space=vmem, size = 0x8000, scoped, tag = 'output window, operand 1']
    #allocation13 [shape = 's32[2]{0}', space=sflag, size = 0x8, scoped, tag = 'scoped memory for tpu_custom_call.1']
    %16 = vsyncpa [#allocation3], 0
    %s17 = scalar_lea.sflag [#allocation3], 1
    %18 = vsyncpa %s17, 0
    %19 = vsyncpa [#allocation6], 0
    %20 = vsyncpa [#allocation9], 0
    %21 = vsyncpa [#allocation4], 0
    %s22 = scalar_lea.sflag [#allocation4], 1
    %23 = vsyncpa %s22, 0
    %24 = vsyncpa [#allocation13], 0
    %s25 = scalar_lea.sflag [#allocation13], 1
    %26 = vsyncpa %s25, 0
    loop: start=0, step=1, limit=4
    $region2: #{tpu_custom_call.1} parent=1 // loop_pre_header
      _
    $region3: #{tpu_custom_call.1} parent=1 // loop_header
      %s28 = sphi 0, %s32
      %p29 = scmp.ge.s32.totalorder %s28, 4
      %s38 = sphi 0, %s40
      %s41 = sphi 0, %s38
      %s42 = sphi 0, %s41
      %s58 = sphi 0, %s42
      %s62 = sphi 0, %s62
      %s64 = sphi 0, %s62
      %s65 = sphi 0, %s64
      %s79 = sphi 0, %s65
      %s83 = sphi 0, %s83
      %s85 = sphi 0, %s83
      %s86 = sphi 0, %s85
      %s100 = sphi 0, %s86
      %s104 = sphi 0, %s104
      %s106 = sphi 0, %s104
      %s107 = sphi 0, %s106
      %s121 = sphi 0, %s107
      %s125 = sphi 0, %s125
      %s127 = sphi 0, %s125
      %s128 = sphi 0, %s127
      %s142 = sphi 0, %s128
      %s146 = sphi 0, %s146
      %s148 = sphi 0, %s146
      %s149 = sphi 0, %s148
      %s163 = sphi 0, %s149
      %s167 = sphi 0, %s167
      %s169 = sphi 0, %s167
      %s170 = sphi 0, %s169
      %s184 = sphi 0, %s170
      %s188 = sphi 0, %s188
      %s190 = sphi 0, %s188
      %s191 = sphi 0, %s190
      %s205 = sphi 0, %s191
      %s209 = sphi 0, %s209
      %s211 = sphi 0, %s209
      %s212 = sphi 0, %s211
      %s226 = sphi 0, %s212
      %s232 = sphi 0, %s234
      %s235 = sphi 0, %s232
      %s236 = sphi 0, %s235
      %s252 = sphi 0, %s236
      %s258 = sphi 0, %s260
      %s261 = sphi 0, %s258
      %s262 = sphi 0, %s261
      %s278 = sphi 0, %s262
    $region4: #{tpu_custom_call.1} parent=1 // loop_header_branch
      %31 = sbr.rel (%p29) target = $region8
    $region5: #{tpu_custom_call.1} parent=1 // loop_body
      %s33 = ssub.s32 %s28, 1
      %s34 = ssub.s32 %s28, 2
      %s35 = sadd.s32 %s28, 1
      %s36 = ssub.s32 %s28, %s35
      %p37 = scmp.eq.s32.totalorder %s36, 0
      %s39 = sadd.s32 %s38, 1
      %s40 = scalar_select %p37, %s38, %s39
      %p43 = pneg %p37
      %p44 = scmp.eq.s32.totalorder %s28, 1
      %p45 = por %p43, %p44
      %p46 = scmp.ne.s32.totalorder %s38, %s41
      %p47 = scmp.eq.s32.totalorder %s28, 0
      %p48 = por %p46, %p47
      %p49 = scmp.ne.s32.totalorder %s38, %s41
      %p50 = scmp.eq.s32.totalorder %s33, 1
      %p51 = por %p49, %p50
      %p52 = scmp.ne.s32.totalorder %s41, %s42
      %p53 = scmp.eq.s32.totalorder %s33, 0
      %p54 = por %p52, %p53
      %p55 = scmp.ne.s32.totalorder %s41, %s42
      %p56 = scmp.eq.s32.totalorder %s34, 1
      %p57 = por %p55, %p56
      %p59 = scmp.ne.s32.totalorder %s42, %s58
      %p60 = scmp.eq.s32.totalorder %s34, 0
      %p61 = por %p59, %p60
      %s63 = sadd.s32 %s62, 1
      %p66 = scmp.eq.s32.totalorder %s28, 1
      %p67 = scmp.ne.s32.totalorder %s62, %s64
      %p68 = scmp.eq.s32.totalorder %s28, 0
      %p69 = por %p67, %p68
      %p70 = scmp.ne.s32.totalorder %s62, %s64
      %p71 = scmp.eq.s32.totalorder %s33, 1
      %p72 = por %p70, %p71
      %p73 = scmp.ne.s32.totalorder %s64, %s65
      %p74 = scmp.eq.s32.totalorder %s33, 0
      %p75 = por %p73, %p74
      %p76 = scmp.ne.s32.totalorder %s64, %s65
      %p77 = scmp.eq.s32.totalorder %s34, 1
      %p78 = por %p76, %p77
      %p80 = scmp.ne.s32.totalorder %s65, %s79
      %p81 = scmp.eq.s32.totalorder %s34, 0
      %p82 = por %p80, %p81
      %s84 = sadd.s32 %s83, 1
      %p87 = scmp.eq.s32.totalorder %s28, 1
      %p88 = scmp.ne.s32.totalorder %s83, %s85
      %p89 = scmp.eq.s32.totalorder %s28, 0
      %p90 = por %p88, %p89
      %p91 = scmp.ne.s32.totalorder %s83, %s85
      %p92 = scmp.eq.s32.totalorder %s33, 1
      %p93 = por %p91, %p92
      %p94 = scmp.ne.s32.totalorder %s85, %s86
      %p95 = scmp.eq.s32.totalorder %s33, 0
      %p96 = por %p94, %p95
      %p97 = scmp.ne.s32.totalorder %s85, %s86
      %p98 = scmp.eq.s32.totalorder %s34, 1
      %p99 = por %p97, %p98
      %p101 = scmp.ne.s32.totalorder %s86, %s100
      %p102 = scmp.eq.s32.totalorder %s34, 0
      %p103 = por %p101, %p102
      %s105 = sadd.s32 %s104, 1
      %p108 = scmp.eq.s32.totalorder %s28, 1
      %p109 = scmp.ne.s32.totalorder %s104, %s106
      %p110 = scmp.eq.s32.totalorder %s28, 0
      %p111 = por %p109, %p110
      %p112 = scmp.ne.s32.totalorder %s104, %s106
      %p113 = scmp.eq.s32.totalorder %s33, 1
      %p114 = por %p112, %p113
      %p115 = scmp.ne.s32.totalorder %s106, %s107
      %p116 = scmp.eq.s32.totalorder %s33, 0
      %p117 = por %p115, %p116
      %p118 = scmp.ne.s32.totalorder %s106, %s107
      %p119 = scmp.eq.s32.totalorder %s34, 1
      %p120 = por %p118, %p119
      %p122 = scmp.ne.s32.totalorder %s107, %s121
      %p123 = scmp.eq.s32.totalorder %s34, 0
      %p124 = por %p122, %p123
      %s126 = sadd.s32 %s125, 1
      %p129 = scmp.eq.s32.totalorder %s28, 1
      %p130 = scmp.ne.s32.totalorder %s125, %s127
      %p131 = scmp.eq.s32.totalorder %s28, 0
      %p132 = por %p130, %p131
      %p133 = scmp.ne.s32.totalorder %s125, %s127
      %p134 = scmp.eq.s32.totalorder %s33, 1
      %p135 = por %p133, %p134
      %p136 = scmp.ne.s32.totalorder %s127, %s128
      %p137 = scmp.eq.s32.totalorder %s33, 0
      %p138 = por %p136, %p137
      %p139 = scmp.ne.s32.totalorder %s127, %s128
      %p140 = scmp.eq.s32.totalorder %s34, 1
      %p141 = por %p139, %p140
      %p143 = scmp.ne.s32.totalorder %s128, %s142
      %p144 = scmp.eq.s32.totalorder %s34, 0
      %p145 = por %p143, %p144
      %s147 = sadd.s32 %s146, 1
      %p150 = scmp.eq.s32.totalorder %s28, 1
      %p151 = scmp.ne.s32.totalorder %s146, %s148
      %p152 = scmp.eq.s32.totalorder %s28, 0
      %p153 = por %p151, %p152
      %p154 = scmp.ne.s32.totalorder %s146, %s148
      %p155 = scmp.eq.s32.totalorder %s33, 1
      %p156 = por %p154, %p155
      %p157 = scmp.ne.s32.totalorder %s148, %s149
      %p158 = scmp.eq.s32.totalorder %s33, 0
      %p159 = por %p157, %p158
      %p160 = scmp.ne.s32.totalorder %s148, %s149
      %p161 = scmp.eq.s32.totalorder %s34, 1
      %p162 = por %p160, %p161
      %p164 = scmp.ne.s32.totalorder %s149, %s163
      %p165 = scmp.eq.s32.totalorder %s34, 0
      %p166 = por %p164, %p165
      %s168 = sadd.s32 %s167, 1
      %p171 = scmp.eq.s32.totalorder %s28, 1
      %p172 = scmp.ne.s32.totalorder %s167, %s169
      %p173 = scmp.eq.s32.totalorder %s28, 0
      %p174 = por %p172, %p173
      %p175 = scmp.ne.s32.totalorder %s167, %s169
      %p176 = scmp.eq.s32.totalorder %s33, 1
      %p177 = por %p175, %p176
      %p178 = scmp.ne.s32.totalorder %s169, %s170
      %p179 = scmp.eq.s32.totalorder %s33, 0
      %p180 = por %p178, %p179
      %p181 = scmp.ne.s32.totalorder %s169, %s170
      %p182 = scmp.eq.s32.totalorder %s34, 1
      %p183 = por %p181, %p182
      %p185 = scmp.ne.s32.totalorder %s170, %s184
      %p186 = scmp.eq.s32.totalorder %s34, 0
      %p187 = por %p185, %p186
      %s189 = sadd.s32 %s188, 1
      %p192 = scmp.eq.s32.totalorder %s28, 1
      %p193 = scmp.ne.s32.totalorder %s188, %s190
      %p194 = scmp.eq.s32.totalorder %s28, 0
      %p195 = por %p193, %p194
      %p196 = scmp.ne.s32.totalorder %s188, %s190
      %p197 = scmp.eq.s32.totalorder %s33, 1
      %p198 = por %p196, %p197
      %p199 = scmp.ne.s32.totalorder %s190, %s191
      %p200 = scmp.eq.s32.totalorder %s33, 0
      %p201 = por %p199, %p200
      %p202 = scmp.ne.s32.totalorder %s190, %s191
      %p203 = scmp.eq.s32.totalorder %s34, 1
      %p204 = por %p202, %p203
      %p206 = scmp.ne.s32.totalorder %s191, %s205
      %p207 = scmp.eq.s32.totalorder %s34, 0
      %p208 = por %p206, %p207
      %s210 = sadd.s32 %s209, 1
      %p213 = scmp.eq.s32.totalorder %s28, 1
      %p214 = scmp.ne.s32.totalorder %s209, %s211
      %p215 = scmp.eq.s32.totalorder %s28, 0
      %p216 = por %p214, %p215
      %p217 = scmp.ne.s32.totalorder %s209, %s211
      %p218 = scmp.eq.s32.totalorder %s33, 1
      %p219 = por %p217, %p218
      %p220 = scmp.ne.s32.totalorder %s211, %s212
      %p221 = scmp.eq.s32.totalorder %s33, 0
      %p222 = por %p220, %p221
      %p223 = scmp.ne.s32.totalorder %s211, %s212
      %p224 = scmp.eq.s32.totalorder %s34, 1
      %p225 = por %p223, %p224
      %p227 = scmp.ne.s32.totalorder %s212, %s226
      %p228 = scmp.eq.s32.totalorder %s34, 0
      %p229 = por %p227, %p228
      %s230 = ssub.s32 %s28, %s35
      %p231 = scmp.eq.s32.totalorder %s230, 0
      %s233 = sadd.s32 %s232, 1
      %s234 = scalar_select %p231, %s232, %s233
      %p237 = pneg %p231
      %p238 = scmp.eq.s32.totalorder %s28, 1
      %p239 = por %p237, %p238
      %p240 = scmp.ne.s32.totalorder %s232, %s235
      %p241 = scmp.eq.s32.totalorder %s28, 0
      %p242 = por %p240, %p241
      %p243 = scmp.ne.s32.totalorder %s232, %s235
      %p244 = scmp.eq.s32.totalorder %s33, 1
      %p245 = por %p243, %p244
      %p246 = scmp.ne.s32.totalorder %s235, %s236
      %p247 = scmp.eq.s32.totalorder %s33, 0
      %p248 = por %p246, %p247
      %p249 = scmp.ne.s32.totalorder %s235, %s236
      %p250 = scmp.eq.s32.totalorder %s34, 1
      %p251 = por %p249, %p250
      %p253 = scmp.ne.s32.totalorder %s236, %s252
      %p254 = scmp.eq.s32.totalorder %s34, 0
      %p255 = por %p253, %p254
      %s256 = ssub.s32 %s28, %s35
      %p257 = scmp.eq.s32.totalorder %s256, 0
      %s259 = sadd.s32 %s258, 1
      %s260 = scalar_select %p257, %s258, %s259
      %p263 = pneg %p257
      %p264 = scmp.eq.s32.totalorder %s28, 1
      %p265 = por %p263, %p264
      %p266 = scmp.ne.s32.totalorder %s258, %s261
      %p267 = scmp.eq.s32.totalorder %s28, 0
      %p268 = por %p266, %p267
      %p269 = scmp.ne.s32.totalorder %s258, %s261
      %p270 = scmp.eq.s32.totalorder %s33, 1
      %p271 = por %p269, %p270
      %p272 = scmp.ne.s32.totalorder %s261, %s262
      %p273 = scmp.eq.s32.totalorder %s33, 0
      %p274 = por %p272, %p273
      %p275 = scmp.ne.s32.totalorder %s261, %s262
      %p276 = scmp.eq.s32.totalorder %s34, 1
      %p277 = por %p275, %p276
      %p279 = scmp.ne.s32.totalorder %s262, %s278
      %p280 = scmp.eq.s32.totalorder %s34, 0
      %p281 = por %p279, %p280
      %p282 = scmp.le.s32.totalorder 1, %s28
      %p283 = scmp.lt.s32.totalorder %s28, 3
      %p284 = pnand %p282, %p283
      %p285 = pneg %p284
      // Predicated region
      $region9: #{tpu_custom_call.1} parent=5 // pred_check
        _
      $region10: #{tpu_custom_call.1} parent=5 // pred_check_branch
        %287 = sbr.rel (%p284) target = $region12
      $region11: #{tpu_custom_call.1} parent=5 // pred_region
        %s288 = ssub.s32 %s28, 1
        // Predicated region
        $region13: #{tpu_custom_call.1} parent=11 // pred_check
          %p289 = pneg %p75
        $region14: #{tpu_custom_call.1} parent=11 // pred_check_branch
          %291 = sbr.rel (%p289) target = $region16
        $region15: #{tpu_custom_call.1} parent=11 // pred_region
          %s293 = ssub.s32 4096, 4096
          %294 = vsyncadd [#allocation6], %s293
          %s295 = sshll.u32 [#allocation5], 4
          %s296 = int_to_ptr.vmem [resolvable:$true] %s295
          %301 = dma.hbm_to_vmem [thread:$0]  %s1, 4096, %s296, [#allocation6], 128, 128, 8
        $region16: #{tpu_custom_call.1} parent=11 // pred_fallthru
          _
        // Predicated region
        $region17: #{tpu_custom_call.1} parent=11 // pred_check
          %p302 = pneg %p96
        $region18: #{tpu_custom_call.1} parent=11 // pred_check_branch
          %304 = sbr.rel (%p302) target = $region20
        $region19: #{tpu_custom_call.1} parent=11 // pred_region
          _
        $region20: #{tpu_custom_call.1} parent=11 // pred_fallthru
          _
        // Predicated region
        $region21: #{tpu_custom_call.1} parent=11 // pred_check
          %p305 = pneg %p117
        $region22: #{tpu_custom_call.1} parent=11 // pred_check_branch
          %307 = sbr.rel (%p305) target = $region24
        $region23: #{tpu_custom_call.1} parent=11 // pred_region
          %s309 = ssub.s32 2048, 2048
          %310 = vsyncadd [#allocation6], %s309
          %s311 = sshll.u32 [#allocation7], 4
          %s312 = int_to_ptr.vmem [resolvable:$true] %s311
          %317 = dma.hbm_to_vmem [thread:$0]  %s3, 2048, %s312, [#allocation6], 128, 128, 8
        $region24: #{tpu_custom_call.1} parent=11 // pred_fallthru
          _
        // Predicated region
        $region25: #{tpu_custom_call.1} parent=11 // pred_check
          %p318 = pneg %p138
        $region26: #{tpu_custom_call.1} parent=11 // pred_check_branch
          %320 = sbr.rel (%p318) target = $region28
        $region27: #{tpu_custom_call.1} parent=11 // pred_region
          _
        $region28: #{tpu_custom_call.1} parent=11 // pred_fallthru
          _
        // Predicated region
        $region29: #{tpu_custom_call.1} parent=11 // pred_check
          %p321 = pneg %p159
        $region30: #{tpu_custom_call.1} parent=11 // pred_check_branch
          %323 = sbr.rel (%p321) target = $region32
        $region31: #{tpu_custom_call.1} parent=11 // pred_region
          %s325 = ssub.s32 2048, 2048
          %326 = vsyncadd [#allocation9], %s325
          %s327 = sshll.u32 [#allocation8], 4
          %s328 = int_to_ptr.vmem [resolvable:$true] %s327
          %333 = dma.hbm_to_vmem [thread:$0]  %s5, 2048, %s328, [#allocation9], 128, 128, 8
        $region32: #{tpu_custom_call.1} parent=11 // pred_fallthru
          _
        // Predicated region
        $region33: #{tpu_custom_call.1} parent=11 // pred_check
          %p334 = pneg %p180
        $region34: #{tpu_custom_call.1} parent=11 // pred_check_branch
          %336 = sbr.rel (%p334) target = $region36
        $region35: #{tpu_custom_call.1} parent=11 // pred_region
          _
        $region36: #{tpu_custom_call.1} parent=11 // pred_fallthru
          _
        // Predicated region
        $region37: #{tpu_custom_call.1} parent=11 // pred_check
          %p337 = pneg %p201
        $region38: #{tpu_custom_call.1} parent=11 // pred_check_branch
          %339 = sbr.rel (%p337) target = $region40
        $region39: #{tpu_custom_call.1} parent=11 // pred_region
          %s341 = ssub.s32 4096, 4096
          %342 = vsyncadd [#allocation9], %s341
          %s343 = sshll.u32 [#allocation10], 4
          %s344 = int_to_ptr.vmem [resolvable:$true] %s343
          %349 = dma.hbm_to_vmem [thread:$0]  %s7, 4096, %s344, [#allocation9], 256, 256, 16
        $region40: #{tpu_custom_call.1} parent=11 // pred_fallthru
          _
        // Predicated region
        $region41: #{tpu_custom_call.1} parent=11 // pred_check
          %p350 = pneg %p222
        $region42: #{tpu_custom_call.1} parent=11 // pred_check_branch
          %352 = sbr.rel (%p350) target = $region44
        $region43: #{tpu_custom_call.1} parent=11 // pred_region
          _
        $region44: #{tpu_custom_call.1} parent=11 // pred_fallthru
          _
      $region12: #{tpu_custom_call.1} parent=5 // pred_fallthru
        _
      %p353 = scmp.lt.s32.totalorder %s28, 2
      // Predicated region
      $region45: #{tpu_custom_call.1} parent=5 // pred_check
        %p354 = pneg %p353
      $region46: #{tpu_custom_call.1} parent=5 // pred_check_branch
        %356 = sbr.rel (%p354) target = $region48
      $region47: #{tpu_custom_call.1} parent=5 // pred_region
        // Predicated region
        $region49: #{tpu_custom_call.1} parent=47 // pred_check
          %p357 = pneg %p48
        $region50: #{tpu_custom_call.1} parent=47 // pred_check_branch
          %359 = sbr.rel (%p357) target = $region52
        $region51: #{tpu_custom_call.1} parent=47 // pred_region
          %s360 = sand.u32 %s38, 1
          %s361 = scalar_lea.sflag [#allocation3], %s360
          %s362 = sand.u32 %s38, 1
          %s363 = smul.addr %s362, 64
          %s364 = scalar_lea.vmem [#allocation2], %s363
          %s365 = smul.u32 4, %s28
          %s367 = ssub.s32 1024, 1024
          %368 = vsyncadd %s361, %s367
          %s369 = smul.addr %s365, 2
          %s370 = smul.addr %s369, 128
          %s371 = scalar_lea.hbm %s0, %s370
          %s372 = sshll.u32 %s364, 4
          %s373 = int_to_ptr.vmem [resolvable:$true] %s372
          %378 = dma.hbm_to_vmem [thread:$0]  %s371, 1024, %s373, %s361, 256, 256, 16
        $region52: #{tpu_custom_call.1} parent=47 // pred_fallthru
          _
      $region48: #{tpu_custom_call.1} parent=5 // pred_fallthru
        _
      %p379 = scmp.le.s32.totalorder 1, %s28
      %p380 = scmp.lt.s32.totalorder %s28, 3
      %p381 = pnand %p379, %p380
      %p382 = pneg %p381
      // Predicated region
      $region53: #{tpu_custom_call.1} parent=5 // pred_check
        _
      $region54: #{tpu_custom_call.1} parent=5 // pred_check_branch
        %384 = sbr.rel (%p381) target = $region56
      $region55: #{tpu_custom_call.1} parent=5 // pred_region
        %s385 = ssub.s32 %s28, 1
        %s386 = sand.u32 %s41, 1
        %s387 = scalar_lea.sflag [#allocation3], %s386
        %s388 = sand.u32 %s41, 1
        %s389 = smul.addr %s388, 64
        %s390 = scalar_lea.vmem [#allocation2], %s389
        // Predicated region
        $region57: #{tpu_custom_call.1} parent=55 // pred_check
          %p391 = pneg %p54
        $region58: #{tpu_custom_call.1} parent=55 // pred_check_branch
          %393 = sbr.rel (%p391) target = $region60
        $region59: #{tpu_custom_call.1} parent=55 // pred_region
          %394 = dma.done %s387, 1024
        $region60: #{tpu_custom_call.1} parent=55 // pred_fallthru
          _
        // Predicated region
        $region61: #{tpu_custom_call.1} parent=55 // pred_check
          %p395 = pneg %p75
        $region62: #{tpu_custom_call.1} parent=55 // pred_check_branch
          %397 = sbr.rel (%p395) target = $region64
        $region63: #{tpu_custom_call.1} parent=55 // pred_region
          %398 = dma.done [#allocation6], 4096
        $region64: #{tpu_custom_call.1} parent=55 // pred_fallthru
          _
        // Predicated region
        $region65: #{tpu_custom_call.1} parent=55 // pred_check
          %p399 = pneg %p117
        $region66: #{tpu_custom_call.1} parent=55 // pred_check_branch
          %401 = sbr.rel (%p399) target = $region68
        $region67: #{tpu_custom_call.1} parent=55 // pred_region
          %402 = dma.done [#allocation6], 2048
        $region68: #{tpu_custom_call.1} parent=55 // pred_fallthru
          _
        // Predicated region
        $region69: #{tpu_custom_call.1} parent=55 // pred_check
          %p403 = pneg %p159
        $region70: #{tpu_custom_call.1} parent=55 // pred_check_branch
          %405 = sbr.rel (%p403) target = $region72
        $region71: #{tpu_custom_call.1} parent=55 // pred_region
          %406 = dma.done [#allocation9], 2048
        $region72: #{tpu_custom_call.1} parent=55 // pred_fallthru
          _
        // Predicated region
        $region73: #{tpu_custom_call.1} parent=55 // pred_check
          %p407 = pneg %p201
        $region74: #{tpu_custom_call.1} parent=55 // pred_check_branch
          %409 = sbr.rel (%p407) target = $region76
        $region75: #{tpu_custom_call.1} parent=55 // pred_region
          %410 = dma.done [#allocation9], 4096
        $region76: #{tpu_custom_call.1} parent=55 // pred_fallthru
          _
        %s411 = sand.u32 %s41, 1
        %s412 = scalar_lea.sflag [#allocation3], %s411
        %s413 = sand.u32 %s41, 1
        %s414 = smul.addr %s413, 64
        %s415 = scalar_lea.vmem [#allocation2], %s414
        %p416 = pneg %p54
        %p417 = pneg %p51
        %p418 = pneg %p75
        %p419 = pneg %p72
        %p420 = pneg %p96
        %p421 = pneg %p93
        %p422 = pneg %p117
        %p423 = pneg %p114
        %p424 = pneg %p138
        %p425 = pneg %p135
        %p426 = pneg %p159
        %p427 = pneg %p156
        %p428 = pneg %p180
        %p429 = pneg %p177
        %p430 = pneg %p201
        %p431 = pneg %p198
        %p432 = pneg %p222
        %p433 = pneg %p219
        %p434 = pneg %p248
        %p435 = pneg %p245
        %s436 = sand.u32 %s235, 1
        %s437 = scalar_lea.sflag [#allocation4], %s436
        %s438 = sand.u32 %s235, 1
        %s439 = smul.addr %s438, 64
        %s440 = scalar_lea.vmem [#allocation11], %s439
        %p441 = pneg %p274
        %p442 = pneg %p271
        %s443 = sand.u32 %s261, 1
        %s444 = scalar_lea.sflag [#allocation13], %s443
        %s445 = sand.u32 %s261, 1
        %s446 = smul.addr %s445, 32
        %s447 = scalar_lea.vmem [#allocation12], %s446
        %s448 = smul.u32 4, %s33
        %s449 = smul.u32 4, %s33
        %s450 = smul.u32 4, %s33
        %v451 = vld [vmem:[%s390] sm:$0xff]
        %v452 = vld [vmem:[%s390 + $0x8] sm:$0xff]
        %v453 = vld [vmem:[%s390 + $0x10] sm:$0xff]
        %v454 = vld [vmem:[%s390 + $0x18] sm:$0xff]
        %v455 = vld [vmem:[%s390 + $0x20] sm:$0xff]
        %v456 = vld [vmem:[%s390 + $0x28] sm:$0xff]
        %v457 = vld [vmem:[%s390 + $0x30] sm:$0xff]
        %v458 = vld [vmem:[%s390 + $0x38] sm:$0xff]
        %v459 = vld [vmem:[#allocation5] sm:$0xff]
        %v460 = vld [vmem:[#allocation5 + $0x8] sm:$0xff]
        %v461 = vld [vmem:[#allocation5 + $0x10] sm:$0xff]
        %v462 = vld [vmem:[#allocation5 + $0x18] sm:$0xff]
        %v463 = vld [vmem:[#allocation5 + $0x20] sm:$0xff]
        %v464 = vld [vmem:[#allocation5 + $0x28] sm:$0xff]
        %v465 = vld [vmem:[#allocation5 + $0x30] sm:$0xff]
        %v466 = vld [vmem:[#allocation5 + $0x38] sm:$0xff]
        %v467 = vld [vmem:[#allocation5 + $0x40] sm:$0xff]
        %v468 = vld [vmem:[#allocation5 + $0x48] sm:$0xff]
        %v469 = vld [vmem:[#allocation5 + $0x50] sm:$0xff]
        %v470 = vld [vmem:[#allocation5 + $0x58] sm:$0xff]
        %v471 = vld [vmem:[#allocation5 + $0x60] sm:$0xff]
        %v472 = vld [vmem:[#allocation5 + $0x68] sm:$0xff]
        %v473 = vld [vmem:[#allocation5 + $0x70] sm:$0xff]
        %v474 = vld [vmem:[#allocation5 + $0x78] sm:$0xff]
        %v475 = vld [vmem:[#allocation5 + $0x80] sm:$0xff]
        %v476 = vld [vmem:[#allocation5 + $0x88] sm:$0xff]
        %v477 = vld [vmem:[#allocation5 + $0x90] sm:$0xff]
        %v478 = vld [vmem:[#allocation5 + $0x98] sm:$0xff]
        %v479 = vld [vmem:[#allocation5 + $0xa0] sm:$0xff]
        %v480 = vld [vmem:[#allocation5 + $0xa8] sm:$0xff]
        %v481 = vld [vmem:[#allocation5 + $0xb0] sm:$0xff]
        %v482 = vld [vmem:[#allocation5 + $0xb8] sm:$0xff]
        %v483 = vld [vmem:[#allocation5 + $0xc0] sm:$0xff]
        %v484 = vld [vmem:[#allocation5 + $0xc8] sm:$0xff]
        %v485 = vld [vmem:[#allocation5 + $0xd0] sm:$0xff]
        %v486 = vld [vmem:[#allocation5 + $0xd8] sm:$0xff]
        %v487 = vld [vmem:[#allocation5 + $0xe0] sm:$0xff]
        %v488 = vld [vmem:[#allocation5 + $0xe8] sm:$0xff]
        %v489 = vld [vmem:[#allocation5 + $0xf0] sm:$0xff]
        %v490 = vld [vmem:[#allocation5 + $0xf8] sm:$0xff]
        %v491 = vld [vmem:[%s2] sm:$0x1]
        %v493 = vlaneseq
        %v494 = vshrl.u32 %v493, 7
        %v495 = vsub.s32 0, %v494
        %v496 = vrot.slane %v491, %v495
        %498 = vmatprep.subr.mxu0 0.0
        %499 = vmatpush1.msra.mxu0 %v459
        %500 = vmatprep.subr.mxu0 0.0
        %501 = vmatpush1.msra.mxu0 %v460
        %502 = vmatprep.subr.mxu0 0.0
        %503 = vmatpush1.msra.mxu0 %v461
        %504 = vmatprep.subr.mxu0 0.0
        %505 = vmatpush1.msra.mxu0 %v462
        %506 = vmatprep.subr.mxu0 0.0
        %507 = vmatpush1.msra.mxu0 %v463
        %508 = vmatprep.subr.mxu0 0.0
        %509 = vmatpush1.msra.mxu0 %v464
        %510 = vmatprep.subr.mxu0 0.0
        %511 = vmatpush1.msra.mxu0 %v465
        %512 = vmatprep.subr.mxu0 0.0
        %513 = vmatpush1.msra.mxu0 %v466
        %514 = vmatprep.subr.mxu0 0.0
        %515 = vmatpush1.msra.mxu0 %v467
        %516 = vmatprep.subr.mxu0 0.0
        %517 = vmatpush1.msra.mxu0 %v468
        %518 = vmatprep.subr.mxu0 0.0
        %519 = vmatpush1.msra.mxu0 %v469
        %520 = vmatprep.subr.mxu0 0.0
        %521 = vmatpush1.msra.mxu0 %v470
        %522 = vmatprep.subr.mxu0 0.0
        %523 = vmatpush1.msra.mxu0 %v471
        %524 = vmatprep.subr.mxu0 0.0
        %525 = vmatpush1.msra.mxu0 %v472
        %526 = vmatprep.subr.mxu0 0.0
        %527 = vmatpush1.msra.mxu0 %v473
        %528 = vmatprep.subr.mxu0 0.0
        %529 = vmatpush1.msra.mxu0 %v474
        %530 = vmatprep.subr.mxu0 0.0
        %531 = vmatpush1.msra.mxu0 %v475
        %532 = vmatprep.subr.mxu0 0.0
        %533 = vmatpush1.msra.mxu0 %v476
        %534 = vmatprep.subr.mxu0 0.0
        %535 = vmatpush1.msra.mxu0 %v477
        %536 = vmatprep.subr.mxu0 0.0
        %537 = vmatpush1.msra.mxu0 %v478
        %538 = vmatprep.subr.mxu0 0.0
        %539 = vmatpush1.msra.mxu0 %v479
        %540 = vmatprep.subr.mxu0 0.0
        %541 = vmatpush1.msra.mxu0 %v480
        %542 = vmatprep.subr.mxu0 0.0
        %543 = vmatpush1.msra.mxu0 %v481
        %544 = vmatprep.subr.mxu0 0.0
        %545 = vmatpush1.msra.mxu0 %v482
        %546 = vmatprep.subr.mxu0 0.0
        %547 = vmatpush1.msra.mxu0 %v483
        %548 = vmatprep.subr.mxu0 0.0
        %549 = vmatpush1.msra.mxu0 %v484
        %550 = vmatprep.subr.mxu0 0.0
        %551 = vmatpush1.msra.mxu0 %v485
        %552 = vmatprep.subr.mxu0 0.0
        %553 = vmatpush1.msra.mxu0 %v486
        %554 = vmatprep.subr.mxu0 0.0
        %555 = vmatpush1.msra.mxu0 %v487
        %556 = vmatprep.subr.mxu0 0.0
        %557 = vmatpush1.msra.mxu0 %v488
        %558 = vmatprep.subr.mxu0 0.0
        %559 = vmatpush1.msra.mxu0 %v489
        %560 = vmatprep.subr.mxu0 0.0
        %561 = vmatpush1.msra.mxu0 %v490
        %562 = vmatprep.mubr.f32.mxu0 %v452
        %563 = vmatmul.mubr.f32.gmra.mrb[0].mxu0 %v451
        %v564 = vpop.f32.mrb[0].mxu0
        %v565 = vadd.f32 %v496, %v564
        %v566 = vpop.f32.mrb[0].mxu0
        %567 = vmatprep.mubr.f32.mxu0 %v454
        %568 = vmatmul.mubr.f32.gmra.mrb[0].mxu0 %v453
        %v569 = vpop.f32.mrb[0].mxu0
        %v570 = vadd.f32 %v496, %v569
        %v571 = vpop.f32.mrb[0].mxu0
        %572 = vmatprep.mubr.f32.mxu0 %v456
        %573 = vmatmul.mubr.f32.gmra.mrb[0].mxu0 %v455
        %v574 = vpop.f32.mrb[0].mxu0
        %v575 = vadd.f32 %v496, %v574
        %v576 = vpop.f32.mrb[0].mxu0
        %577 = vmatprep.mubr.f32.mxu0 %v458
        %578 = vmatmul.mubr.f32.gmra.mrb[0].mxu0 %v457
        %v579 = vpop.f32.mrb[0].mxu0
        %v580 = vadd.f32 %v496, %v579
        %v581 = vpop.f32.mrb[0].mxu0
        %582 = vdwg.mxu0
        %v583 = vmax.f32 %v565, 0.0
        %v584 = vmax.f32 %v570, 0.0
        %v585 = vmax.f32 %v575, 0.0
        %v586 = vmax.f32 %v580, 0.0
        %v587 = vld [vmem:[#allocation7] sm:$0xff]
        %v588 = vld [vmem:[#allocation7 + $0x8] sm:$0xff]
        %v589 = vld [vmem:[#allocation7 + $0x10] sm:$0xff]
        %v590 = vld [vmem:[#allocation7 + $0x18] sm:$0xff]
        %v591 = vld [vmem:[#allocation7 + $0x20] sm:$0xff]
        %v592 = vld [vmem:[#allocation7 + $0x28] sm:$0xff]
        %v593 = vld [vmem:[#allocation7 + $0x30] sm:$0xff]
        %v594 = vld [vmem:[#allocation7 + $0x38] sm:$0xff]
        %v595 = vld [vmem:[#allocation7 + $0x40] sm:$0xff]
        %v596 = vld [vmem:[#allocation7 + $0x48] sm:$0xff]
        %v597 = vld [vmem:[#allocation7 + $0x50] sm:$0xff]
        %v598 = vld [vmem:[#allocation7 + $0x58] sm:$0xff]
        %v599 = vld [vmem:[#allocation7 + $0x60] sm:$0xff]
        %v600 = vld [vmem:[#allocation7 + $0x68] sm:$0xff]
        %v601 = vld [vmem:[#allocation7 + $0x70] sm:$0xff]
        %v602 = vld [vmem:[#allocation7 + $0x78] sm:$0xff]
        %v603 = vld [vmem:[%s4] sm:$0x1]
        %v605 = vlaneseq
        %v606 = vshrl.u32 %v605, 7
        %v607 = vsub.s32 0, %v606
        %v608 = vrot.slane %v603, %v607
        %610 = vmatprep.subr.mxu0 0.0
        %611 = vmatpush1.msra.mxu0 %v587
        %612 = vmatprep.subr.mxu0 0.0
        %613 = vmatpush1.msra.mxu0 %v588
        %614 = vmatprep.subr.mxu0 0.0
        %615 = vmatpush1.msra.mxu0 %v589
        %616 = vmatprep.subr.mxu0 0.0
        %617 = vmatpush1.msra.mxu0 %v590
        %618 = vmatprep.subr.mxu0 0.0
        %619 = vmatpush1.msra.mxu0 %v591
        %620 = vmatprep.subr.mxu0 0.0
        %621 = vmatpush1.msra.mxu0 %v592
        %622 = vmatprep.subr.mxu0 0.0
        %623 = vmatpush1.msra.mxu0 %v593
        %624 = vmatprep.subr.mxu0 0.0
        %625 = vmatpush1.msra.mxu0 %v594
        %626 = vmatprep.subr.mxu0 0.0
        %627 = vmatpush1.msra.mxu0 %v595
        %628 = vmatprep.subr.mxu0 0.0
        %629 = vmatpush1.msra.mxu0 %v596
        %630 = vmatprep.subr.mxu0 0.0
        %631 = vmatpush1.msra.mxu0 %v597
        %632 = vmatprep.subr.mxu0 0.0
        %633 = vmatpush1.msra.mxu0 %v598
        %634 = vmatprep.subr.mxu0 0.0
        %635 = vmatpush1.msra.mxu0 %v599
        %636 = vmatprep.subr.mxu0 0.0
        %637 = vmatpush1.msra.mxu0 %v600
        %638 = vmatprep.subr.mxu0 0.0
        %639 = vmatpush1.msra.mxu0 %v601
        %640 = vmatprep.subr.mxu0 0.0
        %641 = vmatpush1.msra.mxu0 %v602
        %642 = vmatprep.subr.mxu0 0.0
        %643 = vmatpush1.msra.mxu0 0.0
        %644 = vmatprep.subr.mxu0 0.0
        %645 = vmatpush1.msra.mxu0 0.0
        %646 = vmatprep.subr.mxu0 0.0
        %647 = vmatpush1.msra.mxu0 0.0
        %648 = vmatprep.subr.mxu0 0.0
        %649 = vmatpush1.msra.mxu0 0.0
        %650 = vmatprep.subr.mxu0 0.0
        %651 = vmatpush1.msra.mxu0 0.0
        %652 = vmatprep.subr.mxu0 0.0
        %653 = vmatpush1.msra.mxu0 0.0
        %654 = vmatprep.subr.mxu0 0.0
        %655 = vmatpush1.msra.mxu0 0.0
        %656 = vmatprep.subr.mxu0 0.0
        %657 = vmatpush1.msra.mxu0 0.0
        %658 = vmatprep.subr.mxu0 0.0
        %659 = vmatpush1.msra.mxu0 0.0
        %660 = vmatprep.subr.mxu0 0.0
        %661 = vmatpush1.msra.mxu0 0.0
        %662 = vmatprep.subr.mxu0 0.0
        %663 = vmatpush1.msra.mxu0 0.0
        %664 = vmatprep.subr.mxu0 0.0
        %665 = vmatpush1.msra.mxu0 0.0
        %666 = vmatprep.subr.mxu0 0.0
        %667 = vmatpush1.msra.mxu0 0.0
        %668 = vmatprep.subr.mxu0 0.0
        %669 = vmatpush1.msra.mxu0 0.0
        %670 = vmatprep.subr.mxu0 0.0
        %671 = vmatpush1.msra.mxu0 0.0
        %672 = vmatprep.subr.mxu0 0.0
        %673 = vmatpush1.msra.mxu0 0.0
        %674 = vmatprep.mubr.f32.mxu0 0.0
        %675 = vmatmul.mubr.f32.gmra.mrb[0].mxu0 %v583
        %v676 = vpop.f32.mrb[0].mxu0
        %v677 = vadd.f32 %v608, %v676
        %v678 = vpop.f32.mrb[0].mxu0
        %679 = vmatprep.mubr.f32.mxu0 0.0
        %680 = vmatmul.mubr.f32.gmra.mrb[0].mxu0 %v584
        %v681 = vpop.f32.mrb[0].mxu0
        %v682 = vadd.f32 %v608, %v681
        %v683 = vpop.f32.mrb[0].mxu0
        %684 = vmatprep.mubr.f32.mxu0 0.0
        %685 = vmatmul.mubr.f32.gmra.mrb[0].mxu0 %v585
        %v686 = vpop.f32.mrb[0].mxu0
        %v687 = vadd.f32 %v608, %v686
        %v688 = vpop.f32.mrb[0].mxu0
        %689 = vmatprep.mubr.f32.mxu0 0.0
        %690 = vmatmul.mubr.f32.gmra.mrb[0].mxu0 %v586
        %v691 = vpop.f32.mrb[0].mxu0
        %v692 = vadd.f32 %v608, %v691
        %v693 = vpop.f32.mrb[0].mxu0
        %694 = vdwg.mxu0
        %v695 = vmax.f32 %v677, 0.0
        %v696 = vmax.f32 %v682, 0.0
        %v697 = vmax.f32 %v687, 0.0
        %v698 = vmax.f32 %v692, 0.0
        %699 = vst [vmem:[%s447] sm:$0xff] %v695
        %700 = vst [vmem:[%s447 + $0x8] sm:$0xff] %v696
        %701 = vst [vmem:[%s447 + $0x10] sm:$0xff] %v697
        %702 = vst [vmem:[%s447 + $0x18] sm:$0xff] %v698
        %v703 = vld [vmem:[#allocation8] sm:$0xff]
        %v704 = vld [vmem:[#allocation8 + $0x8] sm:$0xff]
        %v705 = vld [vmem:[#allocation8 + $0x10] sm:$0xff]
        %v706 = vld [vmem:[#allocation8 + $0x18] sm:$0xff]
        %v707 = vld [vmem:[#allocation8 + $0x20] sm:$0xff]
        %v708 = vld [vmem:[#allocation8 + $0x28] sm:$0xff]
        %v709 = vld [vmem:[#allocation8 + $0x30] sm:$0xff]
        %v710 = vld [vmem:[#allocation8 + $0x38] sm:$0xff]
        %v711 = vld [vmem:[#allocation8 + $0x40] sm:$0xff]
        %v712 = vld [vmem:[#allocation8 + $0x48] sm:$0xff]
        %v713 = vld [vmem:[#allocation8 + $0x50] sm:$0xff]
        %v714 = vld [vmem:[#allocation8 + $0x58] sm:$0xff]
        %v715 = vld [vmem:[#allocation8 + $0x60] sm:$0xff]
        %v716 = vld [vmem:[#allocation8 + $0x68] sm:$0xff]
        %v717 = vld [vmem:[#allocation8 + $0x70] sm:$0xff]
        %v718 = vld [vmem:[#allocation8 + $0x78] sm:$0xff]
        %v719 = vld [vmem:[%s6] sm:$0x1]
        %v721 = vlaneseq
        %v722 = vshrl.u32 %v721, 7
        %v723 = vsub.s32 0, %v722
        %v724 = vrot.slane %v719, %v723
        %726 = vmatprep.subr.mxu0 0.0
        %727 = vmatpush1.msra.mxu0 %v703
        %728 = vmatprep.subr.mxu0 0.0
        %729 = vmatpush1.msra.mxu0 %v704
        %730 = vmatprep.subr.mxu0 0.0
        %731 = vmatpush1.msra.mxu0 %v705
        %732 = vmatprep.subr.mxu0 0.0
        %733 = vmatpush1.msra.mxu0 %v706
        %734 = vmatprep.subr.mxu0 0.0
        %735 = vmatpush1.msra.mxu0 %v707
        %736 = vmatprep.subr.mxu0 0.0
        %737 = vmatpush1.msra.mxu0 %v708
        %738 = vmatprep.subr.mxu0 0.0
        %739 = vmatpush1.msra.mxu0 %v709
        %740 = vmatprep.subr.mxu0 0.0
        %741 = vmatpush1.msra.mxu0 %v710
        %742 = vmatprep.subr.mxu0 0.0
        %743 = vmatpush1.msra.mxu0 %v711
        %744 = vmatprep.subr.mxu0 0.0
        %745 = vmatpush1.msra.mxu0 %v712
        %746 = vmatprep.subr.mxu0 0.0
        %747 = vmatpush1.msra.mxu0 %v713
        %748 = vmatprep.subr.mxu0 0.0
        %749 = vmatpush1.msra.mxu0 %v714
        %750 = vmatprep.subr.mxu0 0.0
        %751 = vmatpush1.msra.mxu0 %v715
        %752 = vmatprep.subr.mxu0 0.0
        %753 = vmatpush1.msra.mxu0 %v716
        %754 = vmatprep.subr.mxu0 0.0
        %755 = vmatpush1.msra.mxu0 %v717
        %756 = vmatprep.subr.mxu0 0.0
        %757 = vmatpush1.msra.mxu0 %v718
        %758 = vmatprep.subr.mxu0 0.0
        %759 = vmatpush1.msra.mxu0 0.0
        %760 = vmatprep.subr.mxu0 0.0
        %761 = vmatpush1.msra.mxu0 0.0
        %762 = vmatprep.subr.mxu0 0.0
        %763 = vmatpush1.msra.mxu0 0.0
        %764 = vmatprep.subr.mxu0 0.0
        %765 = vmatpush1.msra.mxu0 0.0
        %766 = vmatprep.subr.mxu0 0.0
        %767 = vmatpush1.msra.mxu0 0.0
        %768 = vmatprep.subr.mxu0 0.0
        %769 = vmatpush1.msra.mxu0 0.0
        %770 = vmatprep.subr.mxu0 0.0
        %771 = vmatpush1.msra.mxu0 0.0
        %772 = vmatprep.subr.mxu0 0.0
        %773 = vmatpush1.msra.mxu0 0.0
        %774 = vmatprep.subr.mxu0 0.0
        %775 = vmatpush1.msra.mxu0 0.0
        %776 = vmatprep.subr.mxu0 0.0
        %777 = vmatpush1.msra.mxu0 0.0
        %778 = vmatprep.subr.mxu0 0.0
        %779 = vmatpush1.msra.mxu0 0.0
        %780 = vmatprep.subr.mxu0 0.0
        %781 = vmatpush1.msra.mxu0 0.0
        %782 = vmatprep.subr.mxu0 0.0
        %783 = vmatpush1.msra.mxu0 0.0
        %784 = vmatprep.subr.mxu0 0.0
        %785 = vmatpush1.msra.mxu0 0.0
        %786 = vmatprep.subr.mxu0 0.0
        %787 = vmatpush1.msra.mxu0 0.0
        %788 = vmatprep.subr.mxu0 0.0
        %789 = vmatpush1.msra.mxu0 0.0
        %790 = vmatprep.mubr.f32.mxu0 0.0
        %791 = vmatmul.mubr.f32.gmra.mrb[0].mxu0 %v695
        %v792 = vpop.f32.mrb[0].mxu0
        %v793 = vadd.f32 %v724, %v792
        %v794 = vpop.f32.mrb[0].mxu0
        %795 = vmatprep.mubr.f32.mxu0 0.0
        %796 = vmatmul.mubr.f32.gmra.mrb[0].mxu0 %v696
        %v797 = vpop.f32.mrb[0].mxu0
        %v798 = vadd.f32 %v724, %v797
        %v799 = vpop.f32.mrb[0].mxu0
        %800 = vmatprep.mubr.f32.mxu0 0.0
        %801 = vmatmul.mubr.f32.gmra.mrb[0].mxu0 %v697
        %v802 = vpop.f32.mrb[0].mxu0
        %v803 = vadd.f32 %v724, %v802
        %v804 = vpop.f32.mrb[0].mxu0
        %805 = vmatprep.mubr.f32.mxu0 0.0
        %806 = vmatmul.mubr.f32.gmra.mrb[0].mxu0 %v698
        %v807 = vpop.f32.mrb[0].mxu0
        %v808 = vadd.f32 %v724, %v807
        %v809 = vpop.f32.mrb[0].mxu0
        %810 = vdwg.mxu0
        %v811 = vmax.f32 %v793, 0.0
        %v812 = vmax.f32 %v798, 0.0
        %v813 = vmax.f32 %v803, 0.0
        %v814 = vmax.f32 %v808, 0.0
        %v815 = vld [vmem:[#allocation10] sm:$0xff]
        %v816 = vld [vmem:[#allocation10 + $0x8] sm:$0xff]
        %v817 = vld [vmem:[#allocation10 + $0x10] sm:$0xff]
        %v818 = vld [vmem:[#allocation10 + $0x18] sm:$0xff]
        %v819 = vld [vmem:[#allocation10 + $0x20] sm:$0xff]
        %v820 = vld [vmem:[#allocation10 + $0x28] sm:$0xff]
        %v821 = vld [vmem:[#allocation10 + $0x30] sm:$0xff]
        %v822 = vld [vmem:[#allocation10 + $0x38] sm:$0xff]
        %v823 = vld [vmem:[#allocation10 + $0x40] sm:$0xff]
        %v824 = vld [vmem:[#allocation10 + $0x48] sm:$0xff]
        %v825 = vld [vmem:[#allocation10 + $0x50] sm:$0xff]
        %v826 = vld [vmem:[#allocation10 + $0x58] sm:$0xff]
        %v827 = vld [vmem:[#allocation10 + $0x60] sm:$0xff]
        %v828 = vld [vmem:[#allocation10 + $0x68] sm:$0xff]
        %v829 = vld [vmem:[#allocation10 + $0x70] sm:$0xff]
        %v830 = vld [vmem:[#allocation10 + $0x78] sm:$0xff]
        %v831 = vld [vmem:[#allocation10 + $0x80] sm:$0xff]
        %v832 = vld [vmem:[#allocation10 + $0x88] sm:$0xff]
        %v833 = vld [vmem:[#allocation10 + $0x90] sm:$0xff]
        %v834 = vld [vmem:[#allocation10 + $0x98] sm:$0xff]
        %v835 = vld [vmem:[#allocation10 + $0xa0] sm:$0xff]
        %v836 = vld [vmem:[#allocation10 + $0xa8] sm:$0xff]
        %v837 = vld [vmem:[#allocation10 + $0xb0] sm:$0xff]
        %v838 = vld [vmem:[#allocation10 + $0xb8] sm:$0xff]
        %v839 = vld [vmem:[#allocation10 + $0xc0] sm:$0xff]
        %v840 = vld [vmem:[#allocation10 + $0xc8] sm:$0xff]
        %v841 = vld [vmem:[#allocation10 + $0xd0] sm:$0xff]
        %v842 = vld [vmem:[#allocation10 + $0xd8] sm:$0xff]
        %v843 = vld [vmem:[#allocation10 + $0xe0] sm:$0xff]
        %v844 = vld [vmem:[#allocation10 + $0xe8] sm:$0xff]
        %v845 = vld [vmem:[#allocation10 + $0xf0] sm:$0xff]
        %v846 = vld [vmem:[#allocation10 + $0xf8] sm:$0xff]
        %v847 = vld [vmem:[%s8] sm:$0x3]
        %v849 = vlaneseq
        %v850 = vshrl.u32 %v849, 7
        %v851 = vsub.s32 0, %v850
        %v852 = vrot.slane %v847, %v851
        %v853 = vlaneseq
        %v854 = vshrl.u32 %v853, 7
        %v855 = vsub.s32 1, %v854
        %v856 = vrot.slane %v847, %v855
        %859 = vmatprep.subr.mxu0 %v816
        %860 = vmatpush1.msra.mxu0 %v815
        %861 = vmatprep.subr.mxu0 %v818
        %862 = vmatpush1.msra.mxu0 %v817
        %863 = vmatprep.subr.mxu0 %v820
        %864 = vmatpush1.msra.mxu0 %v819
        %865 = vmatprep.subr.mxu0 %v822
        %866 = vmatpush1.msra.mxu0 %v821
        %867 = vmatprep.subr.mxu0 %v824
        %868 = vmatpush1.msra.mxu0 %v823
        %869 = vmatprep.subr.mxu0 %v826
        %870 = vmatpush1.msra.mxu0 %v825
        %871 = vmatprep.subr.mxu0 %v828
        %872 = vmatpush1.msra.mxu0 %v827
        %873 = vmatprep.subr.mxu0 %v830
        %874 = vmatpush1.msra.mxu0 %v829
        %875 = vmatprep.subr.mxu0 %v832
        %876 = vmatpush1.msra.mxu0 %v831
        %877 = vmatprep.subr.mxu0 %v834
        %878 = vmatpush1.msra.mxu0 %v833
        %879 = vmatprep.subr.mxu0 %v836
        %880 = vmatpush1.msra.mxu0 %v835
        %881 = vmatprep.subr.mxu0 %v838
        %882 = vmatpush1.msra.mxu0 %v837
        %883 = vmatprep.subr.mxu0 %v840
        %884 = vmatpush1.msra.mxu0 %v839
        %885 = vmatprep.subr.mxu0 %v842
        %886 = vmatpush1.msra.mxu0 %v841
        %887 = vmatprep.subr.mxu0 %v844
        %888 = vmatpush1.msra.mxu0 %v843
        %889 = vmatprep.subr.mxu0 %v846
        %890 = vmatpush1.msra.mxu0 %v845
        %891 = vmatprep.subr.mxu0 0.0
        %892 = vmatpush1.msra.mxu0 0.0
        %893 = vmatprep.subr.mxu0 0.0
        %894 = vmatpush1.msra.mxu0 0.0
        %895 = vmatprep.subr.mxu0 0.0
        %896 = vmatpush1.msra.mxu0 0.0
        %897 = vmatprep.subr.mxu0 0.0
        %898 = vmatpush1.msra.mxu0 0.0
        %899 = vmatprep.subr.mxu0 0.0
        %900 = vmatpush1.msra.mxu0 0.0
        %901 = vmatprep.subr.mxu0 0.0
        %902 = vmatpush1.msra.mxu0 0.0
        %903 = vmatprep.subr.mxu0 0.0
        %904 = vmatpush1.msra.mxu0 0.0
        %905 = vmatprep.subr.mxu0 0.0
        %906 = vmatpush1.msra.mxu0 0.0
        %907 = vmatprep.subr.mxu0 0.0
        %908 = vmatpush1.msra.mxu0 0.0
        %909 = vmatprep.subr.mxu0 0.0
        %910 = vmatpush1.msra.mxu0 0.0
        %911 = vmatprep.subr.mxu0 0.0
        %912 = vmatpush1.msra.mxu0 0.0
        %913 = vmatprep.subr.mxu0 0.0
        %914 = vmatpush1.msra.mxu0 0.0
        %915 = vmatprep.subr.mxu0 0.0
        %916 = vmatpush1.msra.mxu0 0.0
        %917 = vmatprep.subr.mxu0 0.0
        %918 = vmatpush1.msra.mxu0 0.0
        %919 = vmatprep.subr.mxu0 0.0
        %920 = vmatpush1.msra.mxu0 0.0
        %921 = vmatprep.subr.mxu0 0.0
        %922 = vmatpush1.msra.mxu0 0.0
        %923 = vmatprep.mubr.f32.mxu0 0.0
        %924 = vmatmul.mubr.f32.gmra.mrb[0].mxu0 %v811
        %v925 = vpop.f32.mrb[0].mxu0
        %v926 = vadd.f32 %v852, %v925
        %v927 = vpop.f32.mrb[0].mxu0
        %v928 = vadd.f32 %v856, %v927
        %929 = vmatprep.mubr.f32.mxu0 0.0
        %930 = vmatmul.mubr.f32.gmra.mrb[0].mxu0 %v812
        %v931 = vpop.f32.mrb[0].mxu0
        %v932 = vadd.f32 %v852, %v931
        %v933 = vpop.f32.mrb[0].mxu0
        %v934 = vadd.f32 %v856, %v933
        %935 = vmatprep.mubr.f32.mxu0 0.0
        %936 = vmatmul.mubr.f32.gmra.mrb[0].mxu0 %v813
        %v937 = vpop.f32.mrb[0].mxu0
        %v938 = vadd.f32 %v852, %v937
        %v939 = vpop.f32.mrb[0].mxu0
        %v940 = vadd.f32 %v856, %v939
        %941 = vmatprep.mubr.f32.mxu0 0.0
        %942 = vmatmul.mubr.f32.gmra.mrb[0].mxu0 %v814
        %v943 = vpop.f32.mrb[0].mxu0
        %v944 = vadd.f32 %v852, %v943
        %v945 = vpop.f32.mrb[0].mxu0
        %v946 = vadd.f32 %v856, %v945
        %947 = vdwg.mxu0
        %v948 = vmax.f32 %v926, 0.0
        %v949 = vmax.f32 %v928, 0.0
        %v950 = vmax.f32 %v932, 0.0
        %v951 = vmax.f32 %v934, 0.0
        %v952 = vmax.f32 %v938, 0.0
        %v953 = vmax.f32 %v940, 0.0
        %v954 = vmax.f32 %v944, 0.0
        %v955 = vmax.f32 %v946, 0.0
        %956 = vst [vmem:[%s440] sm:$0xff] %v948
        %957 = vst [vmem:[%s440 + $0x8] sm:$0xff] %v949
        %958 = vst [vmem:[%s440 + $0x10] sm:$0xff] %v950
        %959 = vst [vmem:[%s440 + $0x18] sm:$0xff] %v951
        %960 = vst [vmem:[%s440 + $0x20] sm:$0xff] %v952
        %961 = vst [vmem:[%s440 + $0x28] sm:$0xff] %v953
        %962 = vst [vmem:[%s440 + $0x30] sm:$0xff] %v954
        %963 = vst [vmem:[%s440 + $0x38] sm:$0xff] %v955
        %s964 = sand.u32 %s235, 1
        %s965 = scalar_lea.sflag [#allocation4], %s964
        %s966 = sand.u32 %s235, 1
        %s967 = smul.addr %s966, 64
        %s968 = scalar_lea.vmem [#allocation11], %s967
        %s969 = sand.u32 %s261, 1
        %s970 = scalar_lea.sflag [#allocation13], %s969
        %s971 = sand.u32 %s261, 1
        %s972 = smul.addr %s971, 32
        %s973 = scalar_lea.vmem [#allocation12], %s972
        // Predicated region
        $region77: #{tpu_custom_call.1} parent=55 // pred_check
          %p974 = pneg %p245
        $region78: #{tpu_custom_call.1} parent=55 // pred_check_branch
          %976 = sbr.rel (%p974) target = $region80
        $region79: #{tpu_custom_call.1} parent=55 // pred_region
          %s977 = smul.u32 4, %s33
          %s979 = ssub.s32 1024, 1024
          %980 = vsyncadd %s965, %s979
          %s981 = smul.addr %s977, 2
          %s982 = smul.addr %s981, 128
          %s983 = scalar_lea.hbm %s9, %s982
          %s984 = sshll.u32 %s968, 4
          %s985 = int_to_ptr.vmem [resolvable:$true] %s984
          %990 = dma.vmem_to_hbm [thread:$0]  %s985, 1024, %s983, %s965, 256, 256, 16
        $region80: #{tpu_custom_call.1} parent=55 // pred_fallthru
          _
        // Predicated region
        $region81: #{tpu_custom_call.1} parent=55 // pred_check
          %p991 = pneg %p271
        $region82: #{tpu_custom_call.1} parent=55 // pred_check_branch
          %993 = sbr.rel (%p991) target = $region84
        $region83: #{tpu_custom_call.1} parent=55 // pred_region
          %s994 = smul.u32 4, %s33
          %s996 = ssub.s32 512, 512
          %997 = vsyncadd %s970, %s996
          %s998 = smul.addr %s994, 128
          %s999 = scalar_lea.hbm %s10, %s998
          %s1000 = sshll.u32 %s973, 4
          %s1001 = int_to_ptr.vmem [resolvable:$true] %s1000
          %1006 = dma.vmem_to_hbm [thread:$0]  %s1001, 512, %s999, %s970, 128, 128, 8
        $region84: #{tpu_custom_call.1} parent=55 // pred_fallthru
          _
      $region56: #{tpu_custom_call.1} parent=5 // pred_fallthru
        _
      %p1007 = scmp.le.s32.totalorder 2, %s28
      // Predicated region
      $region85: #{tpu_custom_call.1} parent=5 // pred_check
        %p1008 = pneg %p1007
      $region86: #{tpu_custom_call.1} parent=5 // pred_check_branch
        %1010 = sbr.rel (%p1008) target = $region88
      $region87: #{tpu_custom_call.1} parent=5 // pred_region
        %s1011 = ssub.s32 %s28, 2
        // Predicated region
        $region89: #{tpu_custom_call.1} parent=87 // pred_check
          %p1012 = pneg %p251
        $region90: #{tpu_custom_call.1} parent=87 // pred_check_branch
          %1014 = sbr.rel (%p1012) target = $region92
        $region91: #{tpu_custom_call.1} parent=87 // pred_region
          %s1015 = sand.u32 %s236, 1
          %s1016 = scalar_lea.sflag [#allocation4], %s1015
          %s1017 = sand.u32 %s236, 1
          %s1018 = smul.addr %s1017, 64
          %s1019 = scalar_lea.vmem [#allocation11], %s1018
          %1020 = dma.done %s1016, 1024
        $region92: #{tpu_custom_call.1} parent=87 // pred_fallthru
          _
        // Predicated region
        $region93: #{tpu_custom_call.1} parent=87 // pred_check
          %p1021 = pneg %p277
        $region94: #{tpu_custom_call.1} parent=87 // pred_check_branch
          %1023 = sbr.rel (%p1021) target = $region96
        $region95: #{tpu_custom_call.1} parent=87 // pred_region
          %s1024 = sand.u32 %s262, 1
          %s1025 = scalar_lea.sflag [#allocation13], %s1024
          %s1026 = sand.u32 %s262, 1
          %s1027 = smul.addr %s1026, 32
          %s1028 = scalar_lea.vmem [#allocation12], %s1027
          %1029 = dma.done %s1025, 512
        $region96: #{tpu_custom_call.1} parent=87 // pred_fallthru
          _
      $region88: #{tpu_custom_call.1} parent=5 // pred_fallthru
        _
    $region6: #{tpu_custom_call.1} parent=1 // loop_footer
      %s32 = sadd.s32 1, %s28
    $region7: #{tpu_custom_call.1} parent=1 // loop_footer_branch
      %27 = sbr.rel target = $region3
    $region8: #{tpu_custom_call.1} parent=1 // loop_exit
      _
    %1030 = vsyncpa [#allocation3], 1
    %s1031 = scalar_lea.sflag [#allocation3], 1
    %1032 = vsyncpa %s1031, 1
    %1033 = vsyncpa [#allocation6], 1
    %1034 = vsyncpa [#allocation9], 1
    %1035 = vsyncpa [#allocation4], 1
    %s1036 = scalar_lea.sflag [#allocation4], 1
    %1037 = vsyncpa %s1036, 1
    %1038 = vsyncpa [#allocation13], 1
    %s1039 = scalar_lea.sflag [#allocation13], 1
    %1040 = vsyncpa %s1039, 1

// kernel: tpu_custom_call.1
$region0: #{tpu_custom_call.1}
  #allocation0 [shape = 'u32[]', space=smem, size = 0x4, offset = 0x4, fixed_abs, tag = 'smem constant byte address 0x4 - core index']
  #allocation1 [shape = 'u32[144,128]{1,0:T(1,128)}', space=vmem, size = 0x12000, scoped, tag = 'internal scratch']
  %s0 = inlined_call_operand.hbm [shape: f32[64,256], index: 0, kind: input, shape index: {}]
  %s1 = inlined_call_operand.hbm [shape: f32[256,128], index: 1, kind: input, shape index: {}]
  %s2 = inlined_call_operand.vmem [shape: f32[1,128], index: 2, kind: input, shape index: {}]
  %s3 = inlined_call_operand.hbm [shape: f32[128,128], index: 3, kind: input, shape index: {}]
  %s4 = inlined_call_operand.vmem [shape: f32[1,128], index: 4, kind: input, shape index: {}]
  %s5 = inlined_call_operand.hbm [shape: f32[128,128], index: 5, kind: input, shape index: {}]
  %s6 = inlined_call_operand.vmem [shape: f32[1,128], index: 6, kind: input, shape index: {}]
  %s7 = inlined_call_operand.hbm [shape: f32[128,256], index: 7, kind: input, shape index: {}]
  %s8 = inlined_call_operand.vmem [shape: f32[1,256], index: 8, kind: input, shape index: {}]
  %s9 = inlined_call_operand.hbm [shape: f32[64,256], index: 9, kind: output, shape index: {0}]
  %s10 = inlined_call_operand.hbm [shape: f32[64,128], index: 10, kind: output, shape index: {1}]
  %11 = xla_tuple %s9, %s10
  %s12 = sld [smem:[#allocation0]]
  $region97: #{tpu_custom_call.1} parent=0
    _
  %s14 = ssub.s32 1, %s12
  %s15 = scalar_select 0, %s14, %s12
  $region1: #{tpu_custom_call.1} parent=0
    #allocation2 [shape = 'u8[65536]{0}', space=vmem, size = 0x10000, scoped, tag = 'input window, operand 0']
    #allocation3 [shape = 's32[2]{0}', space=sflag, size = 0x8, scoped, tag = 'scoped memory for tpu_custom_call.1']
    #allocation4 [shape = 's32[2]{0}', space=sflag, size = 0x8, scoped, tag = 'scoped memory for tpu_custom_call.1']
    #allocation5 [shape = 'u8[131072]{0}', space=vmem, size = 0x20000, scoped, tag = 'input window, operand 1, single buffered']
    #allocation6 [shape = 's32[1]{0}', space=sflag, size = 0x4, scoped, tag = 'scoped memory for tpu_custom_call.1']
    #allocation7 [shape = 'u8[65536]{0}', space=vmem, size = 0x10000, scoped, tag = 'input window, operand 3, single buffered']
    #allocation8 [shape = 'u8[65536]{0}', space=vmem, size = 0x10000, scoped, tag = 'input window, operand 5, single buffered']
    #allocation9 [shape = 's32[1]{0}', space=sflag, size = 0x4, scoped, tag = 'scoped memory for tpu_custom_call.1']
    #allocation10 [shape = 'u8[131072]{0}', space=vmem, size = 0x20000, scoped, tag = 'input window, operand 7, single buffered']
    #allocation11 [shape = 'u8[65536]{0}', space=vmem, size = 0x10000, scoped, tag = 'output window, operand 0']
    #allocation12 [shape = 'u8[32768]{0}', space=vmem, size = 0x8000, scoped, tag = 'output window, operand 1']
    #allocation13 [shape = 's32[2]{0}', space=sflag, size = 0x8, scoped, tag = 'scoped memory for tpu_custom_call.1']
    %16 = vsyncpa [#allocation3], 0
    %s17 = scalar_lea.sflag [#allocation3], 1
    %18 = vsyncpa %s17, 0
    %19 = vsyncpa [#allocation6], 0
    %20 = vsyncpa [#allocation9], 0
    %21 = vsyncpa [#allocation4], 0
    %s22 = scalar_lea.sflag [#allocation4], 1
    %23 = vsyncpa %s22, 0
    %24 = vsyncpa [#allocation13], 0
    %s25 = scalar_lea.sflag [#allocation13], 1
    %26 = vsyncpa %s25, 0
    loop: start=0, step=1, limit=4
    $region2: #{tpu_custom_call.1} parent=1 // loop_pre_header
      _
    $region3: #{tpu_custom_call.1} parent=1 // loop_header
      %s28 = sphi 0, %s32
      %p29 = scmp.ge.s32.totalorder %s28, 4
      %s38 = sphi 0, %s40
      %s41 = sphi 0, %s38
      %s42 = sphi 0, %s41
      %s58 = sphi 0, %s42
      %s62 = sphi 0, %s62
      %s64 = sphi 0, %s62
      %s65 = sphi 0, %s64
      %s79 = sphi 0, %s65
      %s83 = sphi 0, %s83
      %s85 = sphi 0, %s83
      %s86 = sphi 0, %s85
      %s100 = sphi 0, %s86
      %s104 = sphi 0, %s104
      %s106 = sphi 0, %s104
      %s107 = sphi 0, %s106
      %s121 = sphi 0, %s107
      %s125 = sphi 0, %s125
      %s127 = sphi 0, %s125
      %s128 = sphi 0, %s127
      %s142 = sphi 0, %s128
      %s146 = sphi 0, %s146
      %s148 = sphi 0, %s146
      %s149 = sphi 0, %s148
      %s163 = sphi 0, %s149
      %s167 = sphi 0, %s167
      %s169 = sphi 0, %s167
      %s170 = sphi 0, %s169
      %s184 = sphi 0, %s170
      %s188 = sphi 0, %s188
      %s190 = sphi 0, %s188
      %s191 = sphi 0, %s190
      %s205 = sphi 0, %s191
      %s209 = sphi 0, %s209
      %s211 = sphi 0, %s209
      %s212 = sphi 0, %s211
      %s226 = sphi 0, %s212
      %s232 = sphi 0, %s234
      %s235 = sphi 0, %s232
      %s236 = sphi 0, %s235
      %s252 = sphi 0, %s236
      %s258 = sphi 0, %s260
      %s261 = sphi 0, %s258
      %s262 = sphi 0, %s261
      %s278 = sphi 0, %s262
    $region4: #{tpu_custom_call.1} parent=1 // loop_header_branch
      %31 = sbr.rel (%p29) target = $region8
    $region5: #{tpu_custom_call.1} parent=1 // loop_body
      %s33 = ssub.s32 %s28, 1
      %s34 = ssub.s32 %s28, 2
      %s35 = sadd.s32 %s28, 1
      %s36 = ssub.s32 %s28, %s35
      %p37 = scmp.eq.s32.totalorder %s36, 0
      %s39 = sadd.s32 %s38, 1
      %s40 = scalar_select %p37, %s38, %s39
      %p43 = pneg %p37
      %p44 = scmp.eq.s32.totalorder %s28, 1
      %p45 = por %p43, %p44
      %p46 = scmp.ne.s32.totalorder %s38, %s41
      %p47 = scmp.eq.s32.totalorder %s28, 0
      %p48 = por %p46, %p47
      %p49 = scmp.ne.s32.totalorder %s38, %s41
      %p50 = scmp.eq.s32.totalorder %s33, 1
      %p51 = por %p49, %p50
      %p52 = scmp.ne.s32.totalorder %s41, %s42
      %p53 = scmp.eq.s32.totalorder %s33, 0
      %p54 = por %p52, %p53
      %p55 = scmp.ne.s32.totalorder %s41, %s42
      %p56 = scmp.eq.s32.totalorder %s34, 1
      %p57 = por %p55, %p56
      %p59 = scmp.ne.s32.totalorder %s42, %s58
      %p60 = scmp.eq.s32.totalorder %s34, 0
      %p61 = por %p59, %p60
      %s63 = sadd.s32 %s62, 1
      %p66 = scmp.eq.s32.totalorder %s28, 1
      %p67 = scmp.ne.s32.totalorder %s62, %s64
      %p68 = scmp.eq.s32.totalorder %s28, 0
      %p69 = por %p67, %p68
      %p70 = scmp.ne.s32.totalorder %s62, %s64
      %p71 = scmp.eq.s32.totalorder %s33, 1
      %p72 = por %p70, %p71
      %p73 = scmp.ne.s32.totalorder %s64, %s65
      %p74 = scmp.eq.s32.totalorder %s33, 0
      %p75 = por %p73, %p74
      %p76 = scmp.ne.s32.totalorder %s64, %s65
      %p77 = scmp.eq.s32.totalorder %s34, 1
      %p78 = por %p76, %p77
      %p80 = scmp.ne.s32.totalorder %s65, %s79
      %p81 = scmp.eq.s32.totalorder %s34, 0
      %p82 = por %p80, %p81
      %s84 = sadd.s32 %s83, 1
      %p87 = scmp.eq.s32.totalorder %s28, 1
      %p88 = scmp.ne.s32.totalorder %s83, %s85
      %p89 = scmp.eq.s32.totalorder %s28, 0
      %p90 = por %p88, %p89
      %p91 = scmp.ne.s32.totalorder %s83, %s85
      %p92 = scmp.eq.s32.totalorder %s33, 1
      %p93 = por %p91, %p92
      %p94 = scmp.ne.s32.totalorder %s85, %s86
      %p95 = scmp.eq.s32.totalorder %s33, 0
      %p96 = por %p94, %p95
      %p97 = scmp.ne.s32.totalorder %s85, %s86
      %p98 = scmp.eq.s32.totalorder %s34, 1
      %p99 = por %p97, %p98
      %p101 = scmp.ne.s32.totalorder %s86, %s100
      %p102 = scmp.eq.s32.totalorder %s34, 0
      %p103 = por %p101, %p102
      %s105 = sadd.s32 %s104, 1
      %p108 = scmp.eq.s32.totalorder %s28, 1
      %p109 = scmp.ne.s32.totalorder %s104, %s106
      %p110 = scmp.eq.s32.totalorder %s28, 0
      %p111 = por %p109, %p110
      %p112 = scmp.ne.s32.totalorder %s104, %s106
      %p113 = scmp.eq.s32.totalorder %s33, 1
      %p114 = por %p112, %p113
      %p115 = scmp.ne.s32.totalorder %s106, %s107
      %p116 = scmp.eq.s32.totalorder %s33, 0
      %p117 = por %p115, %p116
      %p118 = scmp.ne.s32.totalorder %s106, %s107
      %p119 = scmp.eq.s32.totalorder %s34, 1
      %p120 = por %p118, %p119
      %p122 = scmp.ne.s32.totalorder %s107, %s121
      %p123 = scmp.eq.s32.totalorder %s34, 0
      %p124 = por %p122, %p123
      %s126 = sadd.s32 %s125, 1
      %p129 = scmp.eq.s32.totalorder %s28, 1
      %p130 = scmp.ne.s32.totalorder %s125, %s127
      %p131 = scmp.eq.s32.totalorder %s28, 0
      %p132 = por %p130, %p131
      %p133 = scmp.ne.s32.totalorder %s125, %s127
      %p134 = scmp.eq.s32.totalorder %s33, 1
      %p135 = por %p133, %p134
      %p136 = scmp.ne.s32.totalorder %s127, %s128
      %p137 = scmp.eq.s32.totalorder %s33, 0
      %p138 = por %p136, %p137
      %p139 = scmp.ne.s32.totalorder %s127, %s128
      %p140 = scmp.eq.s32.totalorder %s34, 1
      %p141 = por %p139, %p140
      %p143 = scmp.ne.s32.totalorder %s128, %s142
      %p144 = scmp.eq.s32.totalorder %s34, 0
      %p145 = por %p143, %p144
      %s147 = sadd.s32 %s146, 1
      %p150 = scmp.eq.s32.totalorder %s28, 1
      %p151 = scmp.ne.s32.totalorder %s146, %s148
      %p152 = scmp.eq.s32.totalorder %s28, 0
      %p153 = por %p151, %p152
      %p154 = scmp.ne.s32.totalorder %s146, %s148
      %p155 = scmp.eq.s32.totalorder %s33, 1
      %p156 = por %p154, %p155
      %p157 = scmp.ne.s32.totalorder %s148, %s149
      %p158 = scmp.eq.s32.totalorder %s33, 0
      %p159 = por %p157, %p158
      %p160 = scmp.ne.s32.totalorder %s148, %s149
      %p161 = scmp.eq.s32.totalorder %s34, 1
      %p162 = por %p160, %p161
      %p164 = scmp.ne.s32.totalorder %s149, %s163
      %p165 = scmp.eq.s32.totalorder %s34, 0
      %p166 = por %p164, %p165
      %s168 = sadd.s32 %s167, 1
      %p171 = scmp.eq.s32.totalorder %s28, 1
      %p172 = scmp.ne.s32.totalorder %s167, %s169
      %p173 = scmp.eq.s32.totalorder %s28, 0
      %p174 = por %p172, %p173
      %p175 = scmp.ne.s32.totalorder %s167, %s169
      %p176 = scmp.eq.s32.totalorder %s33, 1
      %p177 = por %p175, %p176
      %p178 = scmp.ne.s32.totalorder %s169, %s170
      %p179 = scmp.eq.s32.totalorder %s33, 0
      %p180 = por %p178, %p179
      %p181 = scmp.ne.s32.totalorder %s169, %s170
      %p182 = scmp.eq.s32.totalorder %s34, 1
      %p183 = por %p181, %p182
      %p185 = scmp.ne.s32.totalorder %s170, %s184
      %p186 = scmp.eq.s32.totalorder %s34, 0
      %p187 = por %p185, %p186
      %s189 = sadd.s32 %s188, 1
      %p192 = scmp.eq.s32.totalorder %s28, 1
      %p193 = scmp.ne.s32.totalorder %s188, %s190
      %p194 = scmp.eq.s32.totalorder %s28, 0
      %p195 = por %p193, %p194
      %p196 = scmp.ne.s32.totalorder %s188, %s190
      %p197 = scmp.eq.s32.totalorder %s33, 1
      %p198 = por %p196, %p197
      %p199 = scmp.ne.s32.totalorder %s190, %s191
      %p200 = scmp.eq.s32.totalorder %s33, 0
      %p201 = por %p199, %p200
      %p202 = scmp.ne.s32.totalorder %s190, %s191
      %p203 = scmp.eq.s32.totalorder %s34, 1
      %p204 = por %p202, %p203
      %p206 = scmp.ne.s32.totalorder %s191, %s205
      %p207 = scmp.eq.s32.totalorder %s34, 0
      %p208 = por %p206, %p207
      %s210 = sadd.s32 %s209, 1
      %p213 = scmp.eq.s32.totalorder %s28, 1
      %p214 = scmp.ne.s32.totalorder %s209, %s211
      %p215 = scmp.eq.s32.totalorder %s28, 0
      %p216 = por %p214, %p215
      %p217 = scmp.ne.s32.totalorder %s209, %s211
      %p218 = scmp.eq.s32.totalorder %s33, 1
      %p219 = por %p217, %p218
      %p220 = scmp.ne.s32.totalorder %s211, %s212
      %p221 = scmp.eq.s32.totalorder %s33, 0
      %p222 = por %p220, %p221
      %p223 = scmp.ne.s32.totalorder %s211, %s212
      %p224 = scmp.eq.s32.totalorder %s34, 1
      %p225 = por %p223, %p224
      %p227 = scmp.ne.s32.totalorder %s212, %s226
      %p228 = scmp.eq.s32.totalorder %s34, 0
      %p229 = por %p227, %p228
      %s230 = ssub.s32 %s28, %s35
      %p231 = scmp.eq.s32.totalorder %s230, 0
      %s233 = sadd.s32 %s232, 1
      %s234 = scalar_select %p231, %s232, %s233
      %p237 = pneg %p231
      %p238 = scmp.eq.s32.totalorder %s28, 1
      %p239 = por %p237, %p238
      %p240 = scmp.ne.s32.totalorder %s232, %s235
      %p241 = scmp.eq.s32.totalorder %s28, 0
      %p242 = por %p240, %p241
      %p243 = scmp.ne.s32.totalorder %s232, %s235
      %p244 = scmp.eq.s32.totalorder %s33, 1
      %p245 = por %p243, %p244
      %p246 = scmp.ne.s32.totalorder %s235, %s236
      %p247 = scmp.eq.s32.totalorder %s33, 0
      %p248 = por %p246, %p247
      %p249 = scmp.ne.s32.totalorder %s235, %s236
      %p250 = scmp.eq.s32.totalorder %s34, 1
      %p251 = por %p249, %p250
      %p253 = scmp.ne.s32.totalorder %s236, %s252
      %p254 = scmp.eq.s32.totalorder %s34, 0
      %p255 = por %p253, %p254
      %s256 = ssub.s32 %s28, %s35
      %p257 = scmp.eq.s32.totalorder %s256, 0
      %s259 = sadd.s32 %s258, 1
      %s260 = scalar_select %p257, %s258, %s259
      %p263 = pneg %p257
      %p264 = scmp.eq.s32.totalorder %s28, 1
      %p265 = por %p263, %p264
      %p266 = scmp.ne.s32.totalorder %s258, %s261
      %p267 = scmp.eq.s32.totalorder %s28, 0
      %p268 = por %p266, %p267
      %p269 = scmp.ne.s32.totalorder %s258, %s261
      %p270 = scmp.eq.s32.totalorder %s33, 1
      %p271 = por %p269, %p270
      %p272 = scmp.ne.s32.totalorder %s261, %s262
      %p273 = scmp.eq.s32.totalorder %s33, 0
      %p274 = por %p272, %p273
      %p275 = scmp.ne.s32.totalorder %s261, %s262
      %p276 = scmp.eq.s32.totalorder %s34, 1
      %p277 = por %p275, %p276
      %p279 = scmp.ne.s32.totalorder %s262, %s278
      %p280 = scmp.eq.s32.totalorder %s34, 0
      %p281 = por %p279, %p280
      %p282 = scmp.le.s32.totalorder 1, %s28
      %p283 = scmp.lt.s32.totalorder %s28, 3
      %p284 = pnand %p282, %p283
      %p285 = pneg %p284
      // Predicated region
      $region9: #{tpu_custom_call.1} parent=5 // pred_check
        _
      $region10: #{tpu_custom_call.1} parent=5 // pred_check_branch
        %287 = sbr.rel (%p284) target = $region12
      $region11: #{tpu_custom_call.1} parent=5 // pred_region
        %s288 = ssub.s32 %s28, 1
        // Predicated region
        $region13: #{tpu_custom_call.1} parent=11 // pred_check
          %p289 = pneg %p75
        $region14: #{tpu_custom_call.1} parent=11 // pred_check_branch
          %291 = sbr.rel (%p289) target = $region16
        $region15: #{tpu_custom_call.1} parent=11 // pred_region
          %s293 = ssub.s32 4096, 4096
          %294 = vsyncadd [#allocation6], %s293
          %s295 = sshll.u32 [#allocation5], 4
          %s296 = int_to_ptr.vmem [resolvable:$true] %s295
          %301 = dma.hbm_to_vmem [thread:$0]  %s1, 4096, %s296, [#allocation6], 128, 128, 8
        $region16: #{tpu_custom_call.1} parent=11 // pred_fallthru
          _
        // Predicated region
        $region17: #{tpu_custom_call.1} parent=11 // pred_check
          %p302 = pneg %p96
        $region18: #{tpu_custom_call.1} parent=11 // pred_check_branch
          %304 = sbr.rel (%p302) target = $region20
        $region19: #{tpu_custom_call.1} parent=11 // pred_region
          _
        $region20: #{tpu_custom_call.1} parent=11 // pred_fallthru
          _
        // Predicated region
        $region21: #{tpu_custom_call.1} parent=11 // pred_check
          %p305 = pneg %p117
        $region22: #{tpu_custom_call.1} parent=11 // pred_check_branch
          %307 = sbr.rel (%p305) target = $region24
        $region23: #{tpu_custom_call.1} parent=11 // pred_region
          %s309 = ssub.s32 2048, 2048
          %310 = vsyncadd [#allocation6], %s309
          %s311 = sshll.u32 [#allocation7], 4
          %s312 = int_to_ptr.vmem [resolvable:$true] %s311
          %317 = dma.hbm_to_vmem [thread:$0]  %s3, 2048, %s312, [#allocation6], 128, 128, 8
        $region24: #{tpu_custom_call.1} parent=11 // pred_fallthru
          _
        // Predicated region
        $region25: #{tpu_custom_call.1} parent=11 // pred_check
          %p318 = pneg %p138
        $region26: #{tpu_custom_call.1} parent=11 // pred_check_branch
          %320 = sbr.rel (%p318) target = $region28
        $region27: #{tpu_custom_call.1} parent=11 // pred_region
          _
        $region28: #{tpu_custom_call.1} parent=11 // pred_fallthru
          _
        // Predicated region
        $region29: #{tpu_custom_call.1} parent=11 // pred_check
          %p321 = pneg %p159
        $region30: #{tpu_custom_call.1} parent=11 // pred_check_branch
          %323 = sbr.rel (%p321) target = $region32
        $region31: #{tpu_custom_call.1} parent=11 // pred_region
          %s325 = ssub.s32 2048, 2048
          %326 = vsyncadd [#allocation9], %s325
          %s327 = sshll.u32 [#allocation8], 4
          %s328 = int_to_ptr.vmem [resolvable:$true] %s327
          %333 = dma.hbm_to_vmem [thread:$0]  %s5, 2048, %s328, [#allocation9], 128, 128, 8
        $region32: #{tpu_custom_call.1} parent=11 // pred_fallthru
          _
        // Predicated region
        $region33: #{tpu_custom_call.1} parent=11 // pred_check
          %p334 = pneg %p180
        $region34: #{tpu_custom_call.1} parent=11 // pred_check_branch
          %336 = sbr.rel (%p334) target = $region36
        $region35: #{tpu_custom_call.1} parent=11 // pred_region
          _
        $region36: #{tpu_custom_call.1} parent=11 // pred_fallthru
          _
        // Predicated region
        $region37: #{tpu_custom_call.1} parent=11 // pred_check
          %p337 = pneg %p201
        $region38: #{tpu_custom_call.1} parent=11 // pred_check_branch
          %339 = sbr.rel (%p337) target = $region40
        $region39: #{tpu_custom_call.1} parent=11 // pred_region
          %s341 = ssub.s32 4096, 4096
          %342 = vsyncadd [#allocation9], %s341
          %s343 = sshll.u32 [#allocation10], 4
          %s344 = int_to_ptr.vmem [resolvable:$true] %s343
          %349 = dma.hbm_to_vmem [thread:$0]  %s7, 4096, %s344, [#allocation9], 256, 256, 16
        $region40: #{tpu_custom_call.1} parent=11 // pred_fallthru
          _
        // Predicated region
        $region41: #{tpu_custom_call.1} parent=11 // pred_check
          %p350 = pneg %p222
        $region42: #{tpu_custom_call.1} parent=11 // pred_check_branch
          %352 = sbr.rel (%p350) target = $region44
        $region43: #{tpu_custom_call.1} parent=11 // pred_region
          _
        $region44: #{tpu_custom_call.1} parent=11 // pred_fallthru
          _
      $region12: #{tpu_custom_call.1} parent=5 // pred_fallthru
        _
      %p353 = scmp.lt.s32.totalorder %s28, 2
      // Predicated region
      $region45: #{tpu_custom_call.1} parent=5 // pred_check
        %p354 = pneg %p353
      $region46: #{tpu_custom_call.1} parent=5 // pred_check_branch
        %356 = sbr.rel (%p354) target = $region48
      $region47: #{tpu_custom_call.1} parent=5 // pred_region
        // Predicated region
        $region49: #{tpu_custom_call.1} parent=47 // pred_check
          %p357 = pneg %p48
        $region50: #{tpu_custom_call.1} parent=47 // pred_check_branch
          %359 = sbr.rel (%p357) target = $region52
        $region51: #{tpu_custom_call.1} parent=47 // pred_region
          %s360 = sand.u32 %s38, 1
          %s361 = scalar_lea.sflag [#allocation3], %s360
          %s362 = sand.u32 %s38, 1
          %s363 = smul.addr %s362, 64
          %s364 = scalar_lea.vmem [#allocation2], %s363
          %s365 = smul.u32 4, %s28
          %s367 = ssub.s32 1024, 1024
          %368 = vsyncadd %s361, %s367
          %s369 = smul.addr %s365, 2
          %s370 = smul.addr %s369, 128
          %s371 = scalar_lea.hbm %s0, %s370
          %s372 = sshll.u32 %s364, 4
          %s373 = int_to_ptr.vmem [resolvable:$true] %s372
          %378 = dma.hbm_to_vmem [thread:$0]  %s371, 1024, %s373, %s361, 256, 256, 16
        $region52: #{tpu_custom_call.1} parent=47 // pred_fallthru
          _
      $region48: #{tpu_custom_call.1} parent=5 // pred_fallthru
        _
      %p379 = scmp.le.s32.totalorder 1, %s28
      %p380 = scmp.lt.s32.totalorder %s28, 3
      %p381 = pnand %p379, %p380
      %p382 = pneg %p381
      // Predicated region
      $region53: #{tpu_custom_call.1} parent=5 // pred_check
        _
      $region54: #{tpu_custom_call.1} parent=5 // pred_check_branch
        %384 = sbr.rel (%p381) target = $region56
      $region55: #{tpu_custom_call.1} parent=5 // pred_region
        %s385 = ssub.s32 %s28, 1
        %s386 = sand.u32 %s41, 1
        %s387 = scalar_lea.sflag [#allocation3], %s386
        %s388 = sand.u32 %s41, 1
        %s389 = smul.addr %s388, 64
        %s390 = scalar_lea.vmem [#allocation2], %s389
        // Predicated region
        $region57: #{tpu_custom_call.1} parent=55 // pred_check
          %p391 = pneg %p54
        $region58: #{tpu_custom_call.1} parent=55 // pred_check_branch
          %393 = sbr.rel (%p391) target = $region60
        $region59: #{tpu_custom_call.1} parent=55 // pred_region
          %394 = dma.done %s387, 1024
        $region60: #{tpu_custom_call.1} parent=55 // pred_fallthru
          _
        // Predicated region
        $region61: #{tpu_custom_call.1} parent=55 // pred_check
          %p395 = pneg %p75
        $region62: #{tpu_custom_call.1} parent=55 // pred_check_branch
          %397 = sbr.rel (%p395) target = $region64
        $region63: #{tpu_custom_call.1} parent=55 // pred_region
          %398 = dma.done [#allocation6], 4096
        $region64: #{tpu_custom_call.1} parent=55 // pred_fallthru
          _
        // Predicated region
        $region65: #{tpu_custom_call.1} parent=55 // pred_check
          %p399 = pneg %p117
        $region66: #{tpu_custom_call.1} parent=55 // pred_check_branch
          %401 = sbr.rel (%p399) target = $region68
        $region67: #{tpu_custom_call.1} parent=55 // pred_region
          %402 = dma.done [#allocation6], 2048
        $region68: #{tpu_custom_call.1} parent=55 // pred_fallthru
          _
        // Predicated region
        $region69: #{tpu_custom_call.1} parent=55 // pred_check
          %p403 = pneg %p159
        $region70: #{tpu_custom_call.1} parent=55 // pred_check_branch
          %405 = sbr.rel (%p403) target = $region72
        $region71: #{tpu_custom_call.1} parent=55 // pred_region
          %406 = dma.done [#allocation9], 2048
        $region72: #{tpu_custom_call.1} parent=55 // pred_fallthru
          _
        // Predicated region
        $region73: #{tpu_custom_call.1} parent=55 // pred_check
          %p407 = pneg %p201
        $region74: #{tpu_custom_call.1} parent=55 // pred_check_branch
          %409 = sbr.rel (%p407) target = $region76
        $region75: #{tpu_custom_call.1} parent=55 // pred_region
          %410 = dma.done [#allocation9], 4096
        $region76: #{tpu_custom_call.1} parent=55 // pred_fallthru
          _
        %s411 = sand.u32 %s41, 1
        %s412 = scalar_lea.sflag [#allocation3], %s411
        %s413 = sand.u32 %s41, 1
        %s414 = smul.addr %s413, 64
        %s415 = scalar_lea.vmem [#allocation2], %s414
        %p416 = pneg %p54
        %p417 = pneg %p51
        %p418 = pneg %p75
        %p419 = pneg %p72
        %p420 = pneg %p96
        %p421 = pneg %p93
        %p422 = pneg %p117
        %p423 = pneg %p114
        %p424 = pneg %p138
        %p425 = pneg %p135
        %p426 = pneg %p159
        %p427 = pneg %p156
        %p428 = pneg %p180
        %p429 = pneg %p177
        %p430 = pneg %p201
        %p431 = pneg %p198
        %p432 = pneg %p222
        %p433 = pneg %p219
        %p434 = pneg %p248
        %p435 = pneg %p245
        %s436 = sand.u32 %s235, 1
        %s437 = scalar_lea.sflag [#allocation4], %s436
        %s438 = sand.u32 %s235, 1
        %s439 = smul.addr %s438, 64
        %s440 = scalar_lea.vmem [#allocation11], %s439
        %p441 = pneg %p274
        %p442 = pneg %p271
        %s443 = sand.u32 %s261, 1
        %s444 = scalar_lea.sflag [#allocation13], %s443
        %s445 = sand.u32 %s261, 1
        %s446 = smul.addr %s445, 32
        %s447 = scalar_lea.vmem [#allocation12], %s446
        %s448 = smul.u32 4, %s33
        %s449 = smul.u32 4, %s33
        %s450 = smul.u32 4, %s33
        %v451 = vld [vmem:[%s390] sm:$0xff]
        %v452 = vld [vmem:[%s390 + $0x8] sm:$0xff]
        %v453 = vld [vmem:[%s390 + $0x10] sm:$0xff]
        %v454 = vld [vmem:[%s390 + $0x18] sm:$0xff]
        %v455 = vld [vmem:[%s390 + $0x20] sm:$0xff]
        %v456 = vld [vmem:[%s390 + $0x28] sm:$0xff]
        %v457 = vld [vmem:[%s390 + $0x30] sm:$0xff]
        %v458 = vld [vmem:[%s390 + $0x38] sm:$0xff]
        %v459 = vld [vmem:[#allocation5] sm:$0xff]
        %v460 = vld [vmem:[#allocation5 + $0x8] sm:$0xff]
        %v461 = vld [vmem:[#allocation5 + $0x10] sm:$0xff]
        %v462 = vld [vmem:[#allocation5 + $0x18] sm:$0xff]
        %v463 = vld [vmem:[#allocation5 + $0x20] sm:$0xff]
        %v464 = vld [vmem:[#allocation5 + $0x28] sm:$0xff]
        %v465 = vld [vmem:[#allocation5 + $0x30] sm:$0xff]
        %v466 = vld [vmem:[#allocation5 + $0x38] sm:$0xff]
        %v467 = vld [vmem:[#allocation5 + $0x40] sm:$0xff]
        %v468 = vld [vmem:[#allocation5 + $0x48] sm:$0xff]
        %v469 = vld [vmem:[#allocation5 + $0x50] sm:$0xff]
        %v470 = vld [vmem:[#allocation5 + $0x58] sm:$0xff]
        %v471 = vld [vmem:[#allocation5 + $0x60] sm:$0xff]
        %v472 = vld [vmem:[#allocation5 + $0x68] sm:$0xff]
        %v473 = vld [vmem:[#allocation5 + $0x70] sm:$0xff]
        %v474 = vld [vmem:[#allocation5 + $0x78] sm:$0xff]
        %v475 = vld [vmem:[#allocation5 + $0x80] sm:$0xff]
        %v476 = vld [vmem:[#allocation5 + $0x88] sm:$0xff]
        %v477 = vld [vmem:[#allocation5 + $0x90] sm:$0xff]
        %v478 = vld [vmem:[#allocation5 + $0x98] sm:$0xff]
        %v479 = vld [vmem:[#allocation5 + $0xa0] sm:$0xff]
        %v480 = vld [vmem:[#allocation5 + $0xa8] sm:$0xff]
        %v481 = vld [vmem:[#allocation5 + $0xb0] sm:$0xff]
        %v482 = vld [vmem:[#allocation5 + $0xb8] sm:$0xff]
        %v483 = vld [vmem:[#allocation5 + $0xc0] sm:$0xff]
        %v484 = vld [vmem:[#allocation5 + $0xc8] sm:$0xff]
        %v485 = vld [vmem:[#allocation5 + $0xd0] sm:$0xff]
        %v486 = vld [vmem:[#allocation5 + $0xd8] sm:$0xff]
        %v487 = vld [vmem:[#allocation5 + $0xe0] sm:$0xff]
        %v488 = vld [vmem:[#allocation5 + $0xe8] sm:$0xff]
        %v489 = vld [vmem:[#allocation5 + $0xf0] sm:$0xff]
        %v490 = vld [vmem:[#allocation5 + $0xf8] sm:$0xff]
        %v491 = vld [vmem:[%s2] sm:$0x1]
        %v493 = vlaneseq
        %v494 = vshrl.u32 %v493, 7
        %v495 = vsub.s32 0, %v494
        %v496 = vrot.slane %v491, %v495
        %498 = vmatprep.subr.mxu0 0.0
        %499 = vmatpush1.msra.mxu0 %v459
        %500 = vmatprep.subr.mxu0 0.0
        %501 = vmatpush1.msra.mxu0 %v460
        %502 = vmatprep.subr.mxu0 0.0
        %503 = vmatpush1.msra.mxu0 %v461
        %504 = vmatprep.subr.mxu0 0.0
        %505 = vmatpush1.msra.mxu0 %v462
        %506 = vmatprep.subr.mxu0 0.0
        %507 = vmatpush1.msra.mxu0 %v463
        %508 = vmatprep.subr.mxu0 0.0
        %509 = vmatpush1.msra.mxu0 %v464
        %510 = vmatprep.subr.mxu0 0.0
        %511 = vmatpush1.msra.mxu0 %v465
        %512 = vmatprep.subr.mxu0 0.0
        %513 = vmatpush1.msra.mxu0 %v466
        %514 = vmatprep.subr.mxu0 0.0
        %515 = vmatpush1.msra.mxu0 %v467
        %516 = vmatprep.subr.mxu0 0.0
        %517 = vmatpush1.msra.mxu0 %v468
        %518 = vmatprep.subr.mxu0 0.0
        %519 = vmatpush1.msra.mxu0 %v469
        %520 = vmatprep.subr.mxu0 0.0
        %521 = vmatpush1.msra.mxu0 %v470
        %522 = vmatprep.subr.mxu0 0.0
        %523 = vmatpush1.msra.mxu0 %v471
        %524 = vmatprep.subr.mxu0 0.0
        %525 = vmatpush1.msra.mxu0 %v472
        %526 = vmatprep.subr.mxu0 0.0
        %527 = vmatpush1.msra.mxu0 %v473
        %528 = vmatprep.subr.mxu0 0.0
        %529 = vmatpush1.msra.mxu0 %v474
        %530 = vmatprep.subr.mxu0 0.0
        %531 = vmatpush1.msra.mxu0 %v475
        %532 = vmatprep.subr.mxu0 0.0
        %533 = vmatpush1.msra.mxu0 %v476
        %534 = vmatprep.subr.mxu0 0.0
        %535 = vmatpush1.msra.mxu0 %v477
        %536 = vmatprep.subr.mxu0 0.0
        %537 = vmatpush1.msra.mxu0 %v478
        %538 = vmatprep.subr.mxu0 0.0
        %539 = vmatpush1.msra.mxu0 %v479
        %540 = vmatprep.subr.mxu0 0.0
        %541 = vmatpush1.msra.mxu0 %v480
        %542 = vmatprep.subr.mxu0 0.0
        %543 = vmatpush1.msra.mxu0 %v481
        %544 = vmatprep.subr.mxu0 0.0
        %545 = vmatpush1.msra.mxu0 %v482
        %546 = vmatprep.subr.mxu0 0.0
        %547 = vmatpush1.msra.mxu0 %v483
        %548 = vmatprep.subr.mxu0 0.0
        %549 = vmatpush1.msra.mxu0 %v484
        %550 = vmatprep.subr.mxu0 0.0
        %551 = vmatpush1.msra.mxu0 %v485
        %552 = vmatprep.subr.mxu0 0.0
        %553 = vmatpush1.msra.mxu0 %v486
        %554 = vmatprep.subr.mxu0 0.0
        %555 = vmatpush1.msra.mxu0 %v487
        %556 = vmatprep.subr.mxu0 0.0
        %557 = vmatpush1.msra.mxu0 %v488
        %558 = vmatprep.subr.mxu0 0.0
        %559 = vmatpush1.msra.mxu0 %v489
        %560 = vmatprep.subr.mxu0 0.0
        %561 = vmatpush1.msra.mxu0 %v490
        %562 = vmatprep.mubr.f32.mxu0 %v452
        %563 = vmatmul.mubr.f32.gmra.mrb[0].mxu0 %v451
        %v564 = vpop.f32.mrb[0].mxu0
        %v565 = vadd.f32 %v496, %v564
        %v566 = vpop.f32.mrb[0].mxu0
        %567 = vmatprep.mubr.f32.mxu0 %v454
        %568 = vmatmul.mubr.f32.gmra.mrb[0].mxu0 %v453
        %v569 = vpop.f32.mrb[0].mxu0
        %v570 = vadd.f32 %v496, %v569
        %v571 = vpop.f32.mrb[0].mxu0
        %572 = vmatprep.mubr.f32.mxu0 %v456
        %573 = vmatmul.mubr.f32.gmra.mrb[0].mxu0 %v455
        %v574 = vpop.f32.mrb[0].mxu0
        %v575 = vadd.f32 %v496, %v574
        %v576 = vpop.f32.mrb[0].mxu0
        %577 = vmatprep.mubr.f32.mxu0 %v458
        %578 = vmatmul.mubr.f32.gmra.mrb[0].mxu0 %v457
        %v579 = vpop.f32.mrb[0].mxu0
        %v580 = vadd.f32 %v496, %v579
        %v581 = vpop.f32.mrb[0].mxu0
        %582 = vdwg.mxu0
        %v583 = vmax.f32 %v565, 0.0
        %v584 = vmax.f32 %v570, 0.0
        %v585 = vmax.f32 %v575, 0.0
        %v586 = vmax.f32 %v580, 0.0
        %v587 = vld [vmem:[#allocation7] sm:$0xff]
        %v588 = vld [vmem:[#allocation7 + $0x8] sm:$0xff]
        %v589 = vld [vmem:[#allocation7 + $0x10] sm:$0xff]
        %v590 = vld [vmem:[#allocation7 + $0x18] sm:$0xff]
        %v591 = vld [vmem:[#allocation7 + $0x20] sm:$0xff]
        %v592 = vld [vmem:[#allocation7 + $0x28] sm:$0xff]
        %v593 = vld [vmem:[#allocation7 + $0x30] sm:$0xff]
        %v594 = vld [vmem:[#allocation7 + $0x38] sm:$0xff]
        %v595 = vld [vmem:[#allocation7 + $0x40] sm:$0xff]
        %v596 = vld [vmem:[#allocation7 + $0x48] sm:$0xff]
        %v597 = vld [vmem:[#allocation7 + $0x50] sm:$0xff]
        %v598 = vld [vmem:[#allocation7 + $0x58] sm:$0xff]
        %v599 = vld [vmem:[#allocation7 + $0x60] sm:$0xff]
        %v600 = vld [vmem:[#allocation7 + $0x68] sm:$0xff]
        %v601 = vld [vmem:[#allocation7 + $0x70] sm:$0xff]
        %v602 = vld [vmem:[#allocation7 + $0x78] sm:$0xff]
        %v603 = vld [vmem:[%s4] sm:$0x1]
        %v605 = vlaneseq
        %v606 = vshrl.u32 %v605, 7
        %v607 = vsub.s32 0, %v606
        %v608 = vrot.slane %v603, %v607
        %610 = vmatprep.subr.mxu0 0.0
        %611 = vmatpush1.msra.mxu0 %v587
        %612 = vmatprep.subr.mxu0 0.0
        %613 = vmatpush1.msra.mxu0 %v588
        %614 = vmatprep.subr.mxu0 0.0
        %615 = vmatpush1.msra.mxu0 %v589
        %616 = vmatprep.subr.mxu0 0.0
        %617 = vmatpush1.msra.mxu0 %v590
        %618 = vmatprep.subr.mxu0 0.0
        %619 = vmatpush1.msra.mxu0 %v591
        %620 = vmatprep.subr.mxu0 0.0
        %621 = vmatpush1.msra.mxu0 %v592
        %622 = vmatprep.subr.mxu0 0.0
        %623 = vmatpush1.msra.mxu0 %v593
        %624 = vmatprep.subr.mxu0 0.0
        %625 = vmatpush1.msra.mxu0 %v594
        %626 = vmatprep.subr.mxu0 0.0
        %627 = vmatpush1.msra.mxu0 %v595
        %628 = vmatprep.subr.mxu0 0.0
        %629 = vmatpush1.msra.mxu0 %v596
        %630 = vmatprep.subr.mxu0 0.0
        %631 = vmatpush1.msra.mxu0 %v597
        %632 = vmatprep.subr.mxu0 0.0
        %633 = vmatpush1.msra.mxu0 %v598
        %634 = vmatprep.subr.mxu0 0.0
        %635 = vmatpush1.msra.mxu0 %v599
        %636 = vmatprep.subr.mxu0 0.0
        %637 = vmatpush1.msra.mxu0 %v600
        %638 = vmatprep.subr.mxu0 0.0
        %639 = vmatpush1.msra.mxu0 %v601
        %640 = vmatprep.subr.mxu0 0.0
        %641 = vmatpush1.msra.mxu0 %v602
        %642 = vmatprep.subr.mxu0 0.0
        %643 = vmatpush1.msra.mxu0 0.0
        %644 = vmatprep.subr.mxu0 0.0
        %645 = vmatpush1.msra.mxu0 0.0
        %646 = vmatprep.subr.mxu0 0.0
        %647 = vmatpush1.msra.mxu0 0.0
        %648 = vmatprep.subr.mxu0 0.0
        %649 = vmatpush1.msra.mxu0 0.0
        %650 = vmatprep.subr.mxu0 0.0
        %651 = vmatpush1.msra.mxu0 0.0
        %652 = vmatprep.subr.mxu0 0.0
        %653 = vmatpush1.msra.mxu0 0.0
        %654 = vmatprep.subr.mxu0 0.0
        %655 = vmatpush1.msra.mxu0 0.0
        %656 = vmatprep.subr.mxu0 0.0
        %657 = vmatpush1.msra.mxu0 0.0
        %658 = vmatprep.subr.mxu0 0.0
        %659 = vmatpush1.msra.mxu0 0.0
        %660 = vmatprep.subr.mxu0 0.0
        %661 = vmatpush1.msra.mxu0 0.0
        %662 = vmatprep.subr.mxu0 0.0
        %663 = vmatpush1.msra.mxu0 0.0
        %664 = vmatprep.subr.mxu0 0.0
        %665 = vmatpush1.msra.mxu0 0.0
        %666 = vmatprep.subr.mxu0 0.0
        %667 = vmatpush1.msra.mxu0 0.0
        %668 = vmatprep.subr.mxu0 0.0
        %669 = vmatpush1.msra.mxu0 0.0
        %670 = vmatprep.subr.mxu0 0.0
        %671 = vmatpush1.msra.mxu0 0.0
        %672 = vmatprep.subr.mxu0 0.0
        %673 = vmatpush1.msra.mxu0 0.0
        %674 = vmatprep.mubr.f32.mxu0 0.0
        %675 = vmatmul.mubr.f32.gmra.mrb[0].mxu0 %v583
        %v676 = vpop.f32.mrb[0].mxu0
        %v677 = vadd.f32 %v608, %v676
        %v678 = vpop.f32.mrb[0].mxu0
        %679 = vmatprep.mubr.f32.mxu0 0.0
        %680 = vmatmul.mubr.f32.gmra.mrb[0].mxu0 %v584
        %v681 = vpop.f32.mrb[0].mxu0
        %v682 = vadd.f32 %v608, %v681
        %v683 = vpop.f32.mrb[0].mxu0
        %684 = vmatprep.mubr.f32.mxu0 0.0
        %685 = vmatmul.mubr.f32.gmra.mrb[0].mxu0 %v585
        %v686 = vpop.f32.mrb[0].mxu0
        %v687 = vadd.f32 %v608, %v686
        %v688 = vpop.f32.mrb[0].mxu0
        %689 = vmatprep.mubr.f32.mxu0 0.0
        %690 = vmatmul.mubr.f32.gmra.mrb[0].mxu0 %v586
        %v691 = vpop.f32.mrb[0].mxu0
        %v692 = vadd.f32 %v608, %v691
        %v693 = vpop.f32.mrb[0].mxu0
        %694 = vdwg.mxu0
        %v695 = vmax.f32 %v677, 0.0
        %v696 = vmax.f32 %v682, 0.0
        %v697 = vmax.f32 %v687, 0.0
        %v698 = vmax.f32 %v692, 0.0
        %699 = vst [vmem:[%s447] sm:$0xff] %v695
        %700 = vst [vmem:[%s447 + $0x8] sm:$0xff] %v696
        %701 = vst [vmem:[%s447 + $0x10] sm:$0xff] %v697
        %702 = vst [vmem:[%s447 + $0x18] sm:$0xff] %v698
        %v703 = vld [vmem:[#allocation8] sm:$0xff]
        %v704 = vld [vmem:[#allocation8 + $0x8] sm:$0xff]
        %v705 = vld [vmem:[#allocation8 + $0x10] sm:$0xff]
        %v706 = vld [vmem:[#allocation8 + $0x18] sm:$0xff]
        %v707 = vld [vmem:[#allocation8 + $0x20] sm:$0xff]
        %v708 = vld [vmem:[#allocation8 + $0x28] sm:$0xff]
        %v709 = vld [vmem:[#allocation8 + $0x30] sm:$0xff]
        %v710 = vld [vmem:[#allocation8 + $0x38] sm:$0xff]
        %v711 = vld [vmem:[#allocation8 + $0x40] sm:$0xff]
        %v712 = vld [vmem:[#allocation8 + $0x48] sm:$0xff]
        %v713 = vld [vmem:[#allocation8 + $0x50] sm:$0xff]
        %v714 = vld [vmem:[#allocation8 + $0x58] sm:$0xff]
        %v715 = vld [vmem:[#allocation8 + $0x60] sm:$0xff]
        %v716 = vld [vmem:[#allocation8 + $0x68] sm:$0xff]
        %v717 = vld [vmem:[#allocation8 + $0x70] sm:$0xff]
        %v718 = vld [vmem:[#allocation8 + $0x78] sm:$0xff]
        %v719 = vld [vmem:[%s6] sm:$0x1]
        %v721 = vlaneseq
        %v722 = vshrl.u32 %v721, 7
        %v723 = vsub.s32 0, %v722
        %v724 = vrot.slane %v719, %v723
        %726 = vmatprep.subr.mxu0 0.0
        %727 = vmatpush1.msra.mxu0 %v703
        %728 = vmatprep.subr.mxu0 0.0
        %729 = vmatpush1.msra.mxu0 %v704
        %730 = vmatprep.subr.mxu0 0.0
        %731 = vmatpush1.msra.mxu0 %v705
        %732 = vmatprep.subr.mxu0 0.0
        %733 = vmatpush1.msra.mxu0 %v706
        %734 = vmatprep.subr.mxu0 0.0
        %735 = vmatpush1.msra.mxu0 %v707
        %736 = vmatprep.subr.mxu0 0.0
        %737 = vmatpush1.msra.mxu0 %v708
        %738 = vmatprep.subr.mxu0 0.0
        %739 = vmatpush1.msra.mxu0 %v709
        %740 = vmatprep.subr.mxu0 0.0
        %741 = vmatpush1.msra.mxu0 %v710
        %742 = vmatprep.subr.mxu0 0.0
        %743 = vmatpush1.msra.mxu0 %v711
        %744 = vmatprep.subr.mxu0 0.0
        %745 = vmatpush1.msra.mxu0 %v712
        %746 = vmatprep.subr.mxu0 0.0
        %747 = vmatpush1.msra.mxu0 %v713
        %748 = vmatprep.subr.mxu0 0.0
        %749 = vmatpush1.msra.mxu0 %v714
        %750 = vmatprep.subr.mxu0 0.0
        %751 = vmatpush1.msra.mxu0 %v715
        %752 = vmatprep.subr.mxu0 0.0
        %753 = vmatpush1.msra.mxu0 %v716
        %754 = vmatprep.subr.mxu0 0.0
        %755 = vmatpush1.msra.mxu0 %v717
        %756 = vmatprep.subr.mxu0 0.0
        %757 = vmatpush1.msra.mxu0 %v718
        %758 = vmatprep.subr.mxu0 0.0
        %759 = vmatpush1.msra.mxu0 0.0
        %760 = vmatprep.subr.mxu0 0.0
        %761 = vmatpush1.msra.mxu0 0.0
        %762 = vmatprep.subr.mxu0 0.0
        %763 = vmatpush1.msra.mxu0 0.0
        %764 = vmatprep.subr.mxu0 0.0
        %765 = vmatpush1.msra.mxu0 0.0
        %766 = vmatprep.subr.mxu0 0.0
        %767 = vmatpush1.msra.mxu0 0.0
        %768 = vmatprep.subr.mxu0 0.0
        %769 = vmatpush1.msra.mxu0 0.0
        %770 = vmatprep.subr.mxu0 0.0
        %771 = vmatpush1.msra.mxu0 0.0
        %772 = vmatprep.subr.mxu0 0.0
        %773 = vmatpush1.msra.mxu0 0.0
        %774 = vmatprep.subr.mxu0 0.0
        %775 = vmatpush1.msra.mxu0 0.0
        %776 = vmatprep.subr.mxu0 0.0
        %777 = vmatpush1.msra.mxu0 0.0
        %778 = vmatprep.subr.mxu0 0.0
        %779 = vmatpush1.msra.mxu0 0.0
        %780 = vmatprep.subr.mxu0 0.0
        %781 = vmatpush1.msra.mxu0 0.0
        %782 = vmatprep.subr.mxu0 0.0
        %783 = vmatpush1.msra.mxu0 0.0
        %784 = vmatprep.subr.mxu0 0.0
        %785 = vmatpush1.msra.mxu0 0.0
        %786 = vmatprep.subr.mxu0 0.0
        %787 = vmatpush1.msra.mxu0 0.0
        %788 = vmatprep.subr.mxu0 0.0
        %789 = vmatpush1.msra.mxu0 0.0
        %790 = vmatprep.mubr.f32.mxu0 0.0
        %791 = vmatmul.mubr.f32.gmra.mrb[0].mxu0 %v695
        %v792 = vpop.f32.mrb[0].mxu0
        %v793 = vadd.f32 %v724, %v792
        %v794 = vpop.f32.mrb[0].mxu0
        %795 = vmatprep.mubr.f32.mxu0 0.0
        %796 = vmatmul.mubr.f32.gmra.mrb[0].mxu0 %v696
        %v797 = vpop.f32.mrb[0].mxu0
        %v798 = vadd.f32 %v724, %v797
        %v799 = vpop.f32.mrb[0].mxu0
        %800 = vmatprep.mubr.f32.mxu0 0.0
        %801 = vmatmul.mubr.f32.gmra.mrb[0].mxu0 %v697
        %v802 = vpop.f32.mrb[0].mxu0
        %v803 = vadd.f32 %v724, %v802
        %v804 = vpop.f32.mrb[0].mxu0
        %805 = vmatprep.mubr.f32.mxu0 0.0
        %806 = vmatmul.mubr.f32.gmra.mrb[0].mxu0 %v698
        %v807 = vpop.f32.mrb[0].mxu0
        %v808 = vadd.f32 %v724, %v807
        %v809 = vpop.f32.mrb[0].mxu0
        %810 = vdwg.mxu0
        %v811 = vmax.f32 %v793, 0.0
        %v812 = vmax.f32 %v798, 0.0
        %v813 = vmax.f32 %v803, 0.0
        %v814 = vmax.f32 %v808, 0.0
        %v815 = vld [vmem:[#allocation10] sm:$0xff]
        %v816 = vld [vmem:[#allocation10 + $0x8] sm:$0xff]
        %v817 = vld [vmem:[#allocation10 + $0x10] sm:$0xff]
        %v818 = vld [vmem:[#allocation10 + $0x18] sm:$0xff]
        %v819 = vld [vmem:[#allocation10 + $0x20] sm:$0xff]
        %v820 = vld [vmem:[#allocation10 + $0x28] sm:$0xff]
        %v821 = vld [vmem:[#allocation10 + $0x30] sm:$0xff]
        %v822 = vld [vmem:[#allocation10 + $0x38] sm:$0xff]
        %v823 = vld [vmem:[#allocation10 + $0x40] sm:$0xff]
        %v824 = vld [vmem:[#allocation10 + $0x48] sm:$0xff]
        %v825 = vld [vmem:[#allocation10 + $0x50] sm:$0xff]
        %v826 = vld [vmem:[#allocation10 + $0x58] sm:$0xff]
        %v827 = vld [vmem:[#allocation10 + $0x60] sm:$0xff]
        %v828 = vld [vmem:[#allocation10 + $0x68] sm:$0xff]
        %v829 = vld [vmem:[#allocation10 + $0x70] sm:$0xff]
        %v830 = vld [vmem:[#allocation10 + $0x78] sm:$0xff]
        %v831 = vld [vmem:[#allocation10 + $0x80] sm:$0xff]
        %v832 = vld [vmem:[#allocation10 + $0x88] sm:$0xff]
        %v833 = vld [vmem:[#allocation10 + $0x90] sm:$0xff]
        %v834 = vld [vmem:[#allocation10 + $0x98] sm:$0xff]
        %v835 = vld [vmem:[#allocation10 + $0xa0] sm:$0xff]
        %v836 = vld [vmem:[#allocation10 + $0xa8] sm:$0xff]
        %v837 = vld [vmem:[#allocation10 + $0xb0] sm:$0xff]
        %v838 = vld [vmem:[#allocation10 + $0xb8] sm:$0xff]
        %v839 = vld [vmem:[#allocation10 + $0xc0] sm:$0xff]
        %v840 = vld [vmem:[#allocation10 + $0xc8] sm:$0xff]
        %v841 = vld [vmem:[#allocation10 + $0xd0] sm:$0xff]
        %v842 = vld [vmem:[#allocation10 + $0xd8] sm:$0xff]
        %v843 = vld [vmem:[#allocation10 + $0xe0] sm:$0xff]
        %v844 = vld [vmem:[#allocation10 + $0xe8] sm:$0xff]
        %v845 = vld [vmem:[#allocation10 + $0xf0] sm:$0xff]
        %v846 = vld [vmem:[#allocation10 + $0xf8] sm:$0xff]
        %v847 = vld [vmem:[%s8] sm:$0x3]
        %v849 = vlaneseq
        %v850 = vshrl.u32 %v849, 7
        %v851 = vsub.s32 0, %v850
        %v852 = vrot.slane %v847, %v851
        %v853 = vlaneseq
        %v854 = vshrl.u32 %v853, 7
        %v855 = vsub.s32 1, %v854
        %v856 = vrot.slane %v847, %v855
        %859 = vmatprep.subr.mxu0 %v816
        %860 = vmatpush1.msra.mxu0 %v815
        %861 = vmatprep.subr.mxu0 %v818
        %862 = vmatpush1.msra.mxu0 %v817
        %863 = vmatprep.subr.mxu0 %v820
        %864 = vmatpush1.msra.mxu0 %v819
        %865 = vmatprep.subr.mxu0 %v822
        %866 = vmatpush1.msra.mxu0 %v821
        %867 = vmatprep.subr.mxu0 %v824
        %868 = vmatpush1.msra.mxu0 %v823
        %869 = vmatprep.subr.mxu0 %v826
        %870 = vmatpush1.msra.mxu0 %v825
        %871 = vmatprep.subr.mxu0 %v828
        %872 = vmatpush1.msra.mxu0 %v827
        %873 = vmatprep.subr.mxu0 %v830
        %874 = vmatpush1.msra.mxu0 %v829
        %875 = vmatprep.subr.mxu0 %v832
        %876 = vmatpush1.msra.mxu0 %v831
        %877 = vmatprep.subr.mxu0 %v834
        %878 = vmatpush1.msra.mxu0 %v833
        %879 = vmatprep.subr.mxu0 %v836
        %880 = vmatpush1.msra.mxu0 %v835
        %881 = vmatprep.subr.mxu0 %v838
        %882 = vmatpush1.msra.mxu0 %v837
        %883 = vmatprep.subr.mxu0 %v840
        %884 = vmatpush1.msra.mxu0 %v839
        %885 = vmatprep.subr.mxu0 %v842
        %886 = vmatpush1.msra.mxu0 %v841
        %887 = vmatprep.subr.mxu0 %v844
        %888 = vmatpush1.msra.mxu0 %v843
        %889 = vmatprep.subr.mxu0 %v846
        %890 = vmatpush1.msra.mxu0 %v845
        %891 = vmatprep.subr.mxu0 0.0
        %892 = vmatpush1.msra.mxu0 0.0
        %893 = vmatprep.subr.mxu0 0.0
        %894 = vmatpush1.msra.mxu0 0.0
        %895 = vmatprep.subr.mxu0 0.0
        %896 = vmatpush1.msra.mxu0 0.0
        %897 = vmatprep.subr.mxu0 0.0
        %898 = vmatpush1.msra.mxu0 0.0
        %899 = vmatprep.subr.mxu0 0.0
        %900 = vmatpush1.msra.mxu0 0.0
        %901 = vmatprep.subr.mxu0 0.0
        %902 = vmatpush1.msra.mxu0 0.0
        %903 = vmatprep.subr.mxu0 0.0
        %904 = vmatpush1.msra.mxu0 0.0
        %905 = vmatprep.subr.mxu0 0.0
        %906 = vmatpush1.msra.mxu0 0.0
        %907 = vmatprep.subr.mxu0 0.0
        %908 = vmatpush1.msra.mxu0 0.0
        %909 = vmatprep.subr.mxu0 0.0
        %910 = vmatpush1.msra.mxu0 0.0
        %911 = vmatprep.subr.mxu0 0.0
        %912 = vmatpush1.msra.mxu0 0.0
        %913 = vmatprep.subr.mxu0 0.0
        %914 = vmatpush1.msra.mxu0 0.0
        %915 = vmatprep.subr.mxu0 0.0
        %916 = vmatpush1.msra.mxu0 0.0
        %917 = vmatprep.subr.mxu0 0.0
        %918 = vmatpush1.msra.mxu0 0.0
        %919 = vmatprep.subr.mxu0 0.0
        %920 = vmatpush1.msra.mxu0 0.0
        %921 = vmatprep.subr.mxu0 0.0
        %922 = vmatpush1.msra.mxu0 0.0
        %923 = vmatprep.mubr.f32.mxu0 0.0
        %924 = vmatmul.mubr.f32.gmra.mrb[0].mxu0 %v811
        %v925 = vpop.f32.mrb[0].mxu0
        %v926 = vadd.f32 %v852, %v925
        %v927 = vpop.f32.mrb[0].mxu0
        %v928 = vadd.f32 %v856, %v927
        %929 = vmatprep.mubr.f32.mxu0 0.0
        %930 = vmatmul.mubr.f32.gmra.mrb[0].mxu0 %v812
        %v931 = vpop.f32.mrb[0].mxu0
        %v932 = vadd.f32 %v852, %v931
        %v933 = vpop.f32.mrb[0].mxu0
        %v934 = vadd.f32 %v856, %v933
        %935 = vmatprep.mubr.f32.mxu0 0.0
        %936 = vmatmul.mubr.f32.gmra.mrb[0].mxu0 %v813
        %v937 = vpop.f32.mrb[0].mxu0
        %v938 = vadd.f32 %v852, %v937
        %v939 = vpop.f32.mrb[0].mxu0
        %v940 = vadd.f32 %v856, %v939
        %941 = vmatprep.mubr.f32.mxu0 0.0
        %942 = vmatmul.mubr.f32.gmra.mrb[0].mxu0 %v814
        %v943 = vpop.f32.mrb[0].mxu0
        %v944 = vadd.f32 %v852, %v943
        %v945 = vpop.f32.mrb[0].mxu0
        %v946 = vadd.f32 %v856, %v945
        %947 = vdwg.mxu0
        %v948 = vmax.f32 %v926, 0.0
        %v949 = vmax.f32 %v928, 0.0
        %v950 = vmax.f32 %v932, 0.0
        %v951 = vmax.f32 %v934, 0.0
        %v952 = vmax.f32 %v938, 0.0
        %v953 = vmax.f32 %v940, 0.0
        %v954 = vmax.f32 %v944, 0.0
        %v955 = vmax.f32 %v946, 0.0
        %956 = vst [vmem:[%s440] sm:$0xff] %v948
        %957 = vst [vmem:[%s440 + $0x8] sm:$0xff] %v949
        %958 = vst [vmem:[%s440 + $0x10] sm:$0xff] %v950
        %959 = vst [vmem:[%s440 + $0x18] sm:$0xff] %v951
        %960 = vst [vmem:[%s440 + $0x20] sm:$0xff] %v952
        %961 = vst [vmem:[%s440 + $0x28] sm:$0xff] %v953
        %962 = vst [vmem:[%s440 + $0x30] sm:$0xff] %v954
        %963 = vst [vmem:[%s440 + $0x38] sm:$0xff] %v955
        %s964 = sand.u32 %s235, 1
        %s965 = scalar_lea.sflag [#allocation4], %s964
        %s966 = sand.u32 %s235, 1
        %s967 = smul.addr %s966, 64
        %s968 = scalar_lea.vmem [#allocation11], %s967
        %s969 = sand.u32 %s261, 1
        %s970 = scalar_lea.sflag [#allocation13], %s969
        %s971 = sand.u32 %s261, 1
        %s972 = smul.addr %s971, 32
        %s973 = scalar_lea.vmem [#allocation12], %s972
        // Predicated region
        $region77: #{tpu_custom_call.1} parent=55 // pred_check
          %p974 = pneg %p245
        $region78: #{tpu_custom_call.1} parent=55 // pred_check_branch
          %976 = sbr.rel (%p974) target = $region80
        $region79: #{tpu_custom_call.1} parent=55 // pred_region
          %s977 = smul.u32 4, %s33
          %s979 = ssub.s32 1024, 1024
          %980 = vsyncadd %s965, %s979
          %s981 = smul.addr %s977, 2
          %s982 = smul.addr %s981, 128
          %s983 = scalar_lea.hbm %s9, %s982
          %s984 = sshll.u32 %s968, 4
          %s985 = int_to_ptr.vmem [resolvable:$true] %s984
          %990 = dma.vmem_to_hbm [thread:$0]  %s985, 1024, %s983, %s965, 256, 256, 16
        $region80: #{tpu_custom_call.1} parent=55 // pred_fallthru
          _
        // Predicated region
        $region81: #{tpu_custom_call.1} parent=55 // pred_check
          %p991 = pneg %p271
        $region82: #{tpu_custom_call.1} parent=55 // pred_check_branch
          %993 = sbr.rel (%p991) target = $region84
        $region83: #{tpu_custom_call.1} parent=55 // pred_region
          %s994 = smul.u32 4, %s33
          %s996 = ssub.s32 512, 512
          %997 = vsyncadd %s970, %s996
          %s998 = smul.addr %s994, 128
          %s999 = scalar_lea.hbm %s10, %s998
          %s1000 = sshll.u32 %s973, 4
          %s1001 = int_to_ptr.vmem [resolvable:$true] %s1000
          %1006 = dma.vmem_to_hbm [thread:$0]  %s1001, 512, %s999, %s970, 128, 128, 8
        $region84: #{tpu_custom_call.1} parent=55 // pred_fallthru
          _
      $region56: #{tpu_custom_call.1} parent=5 // pred_fallthru
        _
      %p1007 = scmp.le.s32.totalorder 2, %s28
      // Predicated region
      $region85: #{tpu_custom_call.1} parent=5 // pred_check
        %p1008 = pneg %p1007
      $region86: #{tpu_custom_call.1} parent=5 // pred_check_branch
        %1010 = sbr.rel (%p1008) target = $region88
      $region87: #{tpu_custom_call.1} parent=5 // pred_region
        %s1011 = ssub.s32 %s28, 2
        // Predicated region
        $region89: #{tpu_custom_call.1} parent=87 // pred_check
          %p1012 = pneg %p251
        $region90: #{tpu_custom_call.1} parent=87 // pred_check_branch
          %1014 = sbr.rel (%p1012) target = $region92
        $region91: #{tpu_custom_call.1} parent=87 // pred_region
          %s1015 = sand.u32 %s236, 1
          %s1016 = scalar_lea.sflag [#allocation4], %s1015
          %s1017 = sand.u32 %s236, 1
          %s1018 = smul.addr %s1017, 64
          %s1019 = scalar_lea.vmem [#allocation11], %s1018
          %1020 = dma.done %s1016, 1024
        $region92: #{tpu_custom_call.1} parent=87 // pred_fallthru
          _
        // Predicated region
        $region93: #{tpu_custom_call.1} parent=87 // pred_check
          %p1021 = pneg %p277
        $region94: #{tpu_custom_call.1} parent=87 // pred_check_branch
          %1023 = sbr.rel (%p1021) target = $region96
        $region95: #{tpu_custom_call.1} parent=87 // pred_region
          %s1024 = sand.u32 %s262, 1
          %s1025 = scalar_lea.sflag [#allocation13], %s1024
          %s1026 = sand.u32 %s262, 1
          %s1027 = smul.addr %s1026, 32
          %s1028 = scalar_lea.vmem [#allocation12], %s1027
          %1029 = dma.done %s1025, 512
        $region96: #{tpu_custom_call.1} parent=87 // pred_fallthru
          _
      $region88: #{tpu_custom_call.1} parent=5 // pred_fallthru
        _
    $region6: #{tpu_custom_call.1} parent=1 // loop_footer
      %s32 = sadd.s32 1, %s28
    $region7: #{tpu_custom_call.1} parent=1 // loop_footer_branch
      %27 = sbr.rel target = $region3
    $region8: #{tpu_custom_call.1} parent=1 // loop_exit
      _
    %1030 = vsyncpa [#allocation3], 1
    %s1031 = scalar_lea.sflag [#allocation3], 1
    %1032 = vsyncpa %s1031, 1
    %1033 = vsyncpa [#allocation6], 1
    %1034 = vsyncpa [#allocation9], 1
    %1035 = vsyncpa [#allocation4], 1
    %s1036 = scalar_lea.sflag [#allocation4], 1
    %1037 = vsyncpa %s1036, 1
    %1038 = vsyncpa [#allocation13], 1
    %s1039 = scalar_lea.sflag [#allocation13], 1
    %1040 = vsyncpa %s1039, 1

</llo_original>
